<compile_context>
chip_gen: v5e
topology: v5e:2x2
jax: 0.10.0
libtpu: 0.0.40
codegen_flags: <defaults>
</compile_context>

<pallas_src>
import functools

import jax
import jax.numpy as jnp
from jax.experimental import pallas as pl
from jax.experimental.pallas import tpu as pltpu

EPS = 1e-5                     # PyTorch LayerNorm default eps
MATMUL_DTYPE = jnp.bfloat16    # MXU-native operand dtype; accumulation stays f32


# ----------------------------------------------------------------------------- helpers
def _layernorm(x, gamma, beta):
    mean = jnp.mean(x, axis=-1, keepdims=True)
    xc = x - mean
    var = jnp.mean(xc * xc, axis=-1, keepdims=True)
    return xc * jax.lax.rsqrt(var + EPS) * gamma + beta


def _dot(a, b):
    # bf16 operands, f32 accumulation on the MXU
    return jnp.dot(a.astype(MATMUL_DTYPE), b.astype(MATMUL_DTYPE),
                   preferred_element_type=jnp.float32)


# ------------------------------------------------------------------------ fused kernel
def timesformer_kernel(tcn_ref, trans_ref, w_dd_ref, w_kv_ref, vecs_ref,
                       out_tcn_ref, out_trans_ref,
                       *, B, S, D, H, K, dilation, left):
    f32 = jnp.float32
    cdt = MATMUL_DTYPE
    N = B * S
    hd = D // H
    scale = 1.0 / (float(hd) ** 0.5)

    # Packed-operand layout (must match init_params):
    #   w_dd : [conv tap 0..K-1, (Wq, Wo) x3 attentions, ff_w]
    #   w_kv : [Wk | Wv] per attention, (3, D, 2D)
    #   vecs : rows = conv_b, ln_gamma x5, ln_beta x5, ff_b, (bq,bk,bv,bo) x3
    R_CONV_B, R_LN_G, R_LN_B, R_FF_B, R_MHA_B = 0, 1, 6, 11, 12
    I_CONV, I_MHA, I_FF = 0, K, K + 6

    def vec(r):                                            # (1, D) static row of the slab
        return vecs_ref[r:r + 1, :]

    # ---------------- hoisted constants (shared by all three attentions) -------------
    lane = jax.lax.broadcasted_iota(jnp.int32, (1, D), 1)
    head_masks = [((lane >= h * hd) & (lane < (h + 1) * hd)).astype(cdt)
                  for h in range(H)]                       # H x (1, D), bf16 0/1
    ri = jax.lax.broadcasted_iota(jnp.int32, (N, N), 0)
    ci = jax.lax.broadcasted_iota(jnp.int32, (N, N), 1)
    same_batch = None
    for b in range(B):                                     # static, no integer div/mod
        lo, hi = b * S, (b + 1) * S
        blk = (ri >= lo) & (ri < hi) & (ci >= lo) & (ci < hi)
        same_batch = blk if same_batch is None else (same_batch | blk)
    batch_bias = jnp.where(same_batch, 0.0, -1e30).astype(f32)   # block-diag additive mask
    t_iota = jax.lax.broadcasted_iota(jnp.int32, (1, S, 1), 1)   # within-batch time index

    x_tcn = tcn_ref[...].astype(f32)                       # (B*S, D)
    x_trn = trans_ref[...].astype(f32)                     # (B*S, D)

    # ---------------- TCN branch: dilated 'same' Conv1d -> ReLU -> LayerNorm ----------
    # matmul-then-shift: y_k = x @ W_k, then static roll along the batch-folded
    # time/sublane axis + edge mask (rows that wrap across batches are exactly the
    # out-of-range rows, so one mask covers both padding and batch boundaries).
    acc3 = jnp.zeros((B, S, D), f32)
    for k in range(K):                                     # static tap loop
        d = k * dilation - left                            # per-tap time offset
        y = _dot(x_tcn, w_dd_ref[I_CONV + k])              # (N, D)
        if d != 0:
            y = pltpu.roll(y, shift=(-d) % N, axis=0)      # XLU sublane rotate
        valid = ((t_iota + d >= 0) & (t_iota + d < S)).astype(f32)   # (1, S, 1)
        acc3 = acc3 + y.reshape(B, S, D) * valid
    acc = acc3.reshape(N, D) + vec(R_CONV_B)
    tcn = _layernorm(jnp.maximum(acc, 0.0), vec(R_LN_G + 0), vec(R_LN_B + 0))   # norm_tcn

    # ---------------- multihead attention (batch-folded, heads via lane masks) --------
    def mha(q_in, kv_in, m):
        wq = w_dd_ref[I_MHA + 2 * m]
        wo = w_dd_ref[I_MHA + 2 * m + 1]
        bq, bk, bv, bo = tuple(vec(R_MHA_B + 4 * m + i) for i in range(4))
        q = (_dot(q_in, wq) + bq) * scale                  # scale folded once per mha
        kv = _dot(kv_in, w_kv_ref[m])                      # fused K|V projection, (N, 2D)
        k = kv[:, :D] + bk
        v = kv[:, D:2 * D] + bv
        q_bf = q.astype(cdt)
        kT_bf = k.T.astype(cdt)                            # one explicit K^T per attention
        v_bf = v.astype(cdt)
        attn = jnp.zeros((N, D), f32)
        for h in range(H):                                 # static head loop
            mh = head_masks[h]                             # bf16 lane mask
            s = jnp.dot(q_bf * mh, kT_bf, preferred_element_type=f32)   # (N, N) scores
            s = s + batch_bias                             # kill cross-batch attention
            s = s - jnp.max(s, axis=-1, keepdims=True)
            p = jnp.exp(s)
            p = p * pl.reciprocal(jnp.sum(p, axis=-1, keepdims=True), approx=True)
            attn = attn + jnp.dot(p.astype(cdt), v_bf * mh,
                                  preferred_element_type=f32)
        return _dot(attn, wo) + bo

    # ---------------- transformer branch ----------------------------------------------
    x1 = _layernorm(mha(x_trn, x_trn, 0) + x_trn, vec(R_LN_G + 1), vec(R_LN_B + 1))   # norm1
    xff = jnp.maximum(_dot(x1, w_dd_ref[I_FF]) + vec(R_FF_B), 0.0)                    # ff_conv
    xff = _layernorm(xff, vec(R_LN_G + 2), vec(R_LN_B + 2))                           # ff_norm
    trans_out = xff + x1

    # ---------------- cross attentions -------------------------------------------------
    chnl_trans = _layernorm(mha(trans_out, tcn, 1) + trans_out,
                            vec(R_LN_G + 3), vec(R_LN_B + 3))                         # norm2
    chnl_tcn = _layernorm(mha(tcn, trans_out, 2) + tcn,
                          vec(R_LN_G + 4), vec(R_LN_B + 4))                           # norm3

    # flat 2D stores (no reshape on the store path); wrapper reshapes back to (B, S, D)
    out_tcn_ref[...] = chnl_tcn.astype(out_tcn_ref.dtype)
    out_trans_ref[...] = chnl_trans.astype(out_trans_ref.dtype)


# --------------------------------------------------------------------------- wrapper
def timesformer_layer(tcn_input, trans_input, params, *, num_heads, kernel_size, dilation):
    B, S, D = tcn_input.shape
    N = B * S
    assert D % num_heads == 0, "embed dim must be divisible by num_heads"
    total_pad = dilation * (kernel_size - 1)
    left = total_pad // 2

    kern = functools.partial(timesformer_kernel, B=B, S=S, D=D, H=num_heads,
                             K=kernel_size, dilation=dilation, left=left)
    vmem = pl.BlockSpec(memory_space=pltpu.MemorySpace.VMEM)

    # Grid-less single invocation (everything fits VMEM at these sizes).
    # For larger B on v7x (2 TCs) add a grid over B with dimension_semantics=("parallel",).
    out_tcn, out_trans = pl.pallas_call(
        kern,
        out_shape=(jax.ShapeDtypeStruct((N, D), tcn_input.dtype),
                   jax.ShapeDtypeStruct((N, D), trans_input.dtype)),
        in_specs=[vmem] * 5,
        out_specs=(vmem, vmem),
        compiler_params=pltpu.CompilerParams(vmem_limit_bytes=32 * 1024 * 1024),
    )(tcn_input.reshape(N, D), trans_input.reshape(N, D),
      params["w_dd"], params["w_kv"], params["vecs"])
    return out_tcn.reshape(B, S, D), out_trans.reshape(B, S, D)


# -------------------------------------------------------------- deterministic params
def init_params(key, dim, kernel_size):
    """Builds pre-packed operand slabs (see kernel header for the layout)."""
    D, K = dim, kernel_size
    keys = iter(jax.random.split(key, 32))

    def nrm(shape, scale=0.1):
        return scale * jax.random.normal(next(keys), shape, jnp.float32)

    conv_w = nrm((D, D, K))                 # PyTorch Conv1d weight (Dout, Din, K)
    conv_b = nrm((D,))
    ff_w = nrm((D, D, 1))                   # 1x1 Conv1d weight
    ff_b = nrm((D,))
    ln_gamma = 1.0 + nrm((5, D))            # [norm_tcn, norm1, ff_norm, norm2, norm3]
    ln_beta = nrm((5, D))

    def mha_raw():
        ipw = nrm((3 * D, D))               # PyTorch in_proj_weight (3D, D)
        ipb = nrm((3 * D,))                 # in_proj_bias
        ow = nrm((D, D))                    # out_proj.weight
        ob = nrm((D,))                      # out_proj.bias
        return ipw, ipb, ow, ob

    mhas = [mha_raw() for _ in range(3)]    # [mha1, cross1, cross2]

    # ---- pack ----
    conv_taps = jnp.transpose(conv_w, (2, 1, 0))            # (K, Din, Dout), x @ W form
    dd = [conv_taps[k] for k in range(K)]
    kvs = []
    vec_rows = ([conv_b] + [ln_gamma[i] for i in range(5)]
                + [ln_beta[i] for i in range(5)] + [ff_b])
    for ipw, ipb, ow, ob in mhas:
        wq = ipw[:D].T                                       # x @ Wq
        wk = ipw[D:2 * D].T
        wv = ipw[2 * D:].T
        dd += [wq, ow.T]
        kvs.append(jnp.concatenate([wk, wv], axis=1))        # (D, 2D) fused K|V
        vec_rows += [ipb[:D], ipb[D:2 * D], ipb[2 * D:], ob]
    dd.append(ff_w[:, :, 0].T)                               # ff at index K+6

    return {"w_dd": jnp.stack(dd),          # (K+7, D, D)
            "w_kv": jnp.stack(kvs),         # (3, D, 2D)
            "vecs": jnp.stack(vec_rows)}    # (24, D)


# ------------------------------------------------------------------ pure-JAX reference
def _ln_ref(x, g, b):
    m = x.mean(-1, keepdims=True)
    v = ((x - m) ** 2).mean(-1, keepdims=True)
    return (x - m) / jnp.sqrt(v + EPS) * g + b


def reference_forward(tcn_input, trans_input, params, *, num_heads, kernel_size, dilation):
    w_dd, w_kv, vecs = params["w_dd"], params["w_kv"], params["vecs"]
    B, S, D = tcn_input.shape
    K = kernel_size
    hd = D // num_heads
    g = lambda i: vecs[1 + i]
    bta = lambda i: vecs[6 + i]

    total_pad = dilation * (K - 1)
    left = total_pad // 2
    xpad = jnp.pad(tcn_input, ((0, 0), (left, total_pad - left), (0, 0)))
    acc = jnp.zeros((B, S, D), jnp.float32)
    for k in range(K):
        acc = acc + xpad[:, k * dilation:k * dilation + S, :] @ w_dd[k]
    tcn_out = _ln_ref(jnp.maximum(acc + vecs[0], 0.0), g(0), bta(0))

    def mha_ref(qin, kvin, m):
        wq, wo = w_dd[K + 2 * m], w_dd[K + 2 * m + 1]
        wk, wv = w_kv[m][:, :D], w_kv[m][:, D:]
        bq, bk, bv, bo = (vecs[12 + 4 * m + i] for i in range(4))
        q = qin @ wq + bq
        k_ = kvin @ wk + bk
        v = kvin @ wv + bv
        q = q.reshape(B, -1, num_heads, hd).transpose(0, 2, 1, 3)
        k_ = k_.reshape(B, -1, num_heads, hd).transpose(0, 2, 1, 3)
        v = v.reshape(B, -1, num_heads, hd).transpose(0, 2, 1, 3)
        s = jnp.einsum("bhqd,bhkd->bhqk", q, k_) / (float(hd) ** 0.5)
        a = jax.nn.softmax(s, axis=-1)
        o = jnp.einsum("bhqk,bhkd->bhqd", a, v).transpose(0, 2, 1, 3).reshape(B, -1, D)
        return o @ wo + bo

    x = _ln_ref(mha_ref(trans_input, trans_input, 0) + trans_input, g(1), bta(1))
    x_ff = _ln_ref(jnp.maximum(x @ w_dd[K + 6] + vecs[11], 0.0), g(2), bta(2))
    trans_out = x_ff + x
    chnl_trans = _ln_ref(mha_ref(trans_out, tcn_out, 1) + trans_out, g(3), bta(3))
    chnl_tcn = _ln_ref(mha_ref(tcn_out, trans_out, 2) + tcn_out, g(4), bta(4))
    return chnl_tcn, chnl_trans


# ------------------------------------------------------------------------------- main
if __name__ == "__main__":
    B, S, D = 2, 8, 32
    NUM_HEADS, K, DIL = 4, 3, 2

    key = jax.random.PRNGKey(0)
    k_tcn, k_trans, k_par = jax.random.split(key, 3)
    tcn_input = jax.random.normal(k_tcn, (B, S, D), jnp.float32)
    trans_input = jax.random.normal(k_trans, (B, S, D), jnp.float32)
    params = init_params(k_par, D, K)

    fwd = jax.jit(functools.partial(timesformer_layer,
                                    num_heads=NUM_HEADS, kernel_size=K, dilation=DIL))
    chnl_tcn, chnl_trans = fwd(tcn_input, trans_input, params)
    jax.block_until_ready((chnl_tcn, chnl_trans))

    ref_tcn, ref_trans = reference_forward(tcn_input, trans_input, params,
                                           num_heads=NUM_HEADS, kernel_size=K, dilation=DIL)
    # bf16 MXU operands (f32 accumulation) + EUP approx reciprocal vs pure-f32 reference.
    assert chnl_tcn.shape == (B, S, D) and chnl_trans.shape == (B, S, D)
    assert jnp.allclose(chnl_tcn, ref_tcn, atol=5e-2, rtol=5e-2), \
        float(jnp.max(jnp.abs(chnl_tcn - ref_tcn)))
    assert jnp.allclose(chnl_trans, ref_trans, atol=5e-2, rtol=5e-2), \
        float(jnp.max(jnp.abs(chnl_trans - ref_trans)))

    print("KERNEL_OK")
</pallas_src>

<mosaic_0001>
module attributes {stable_mosaic.version = 11 : i64} {
  func.func @timesformer_kernel(%arg0: memref<16x32xf32, #tpu.memory_space<vmem>>, %arg1: memref<16x32xf32, #tpu.memory_space<vmem>>, %arg2: memref<10x32x32xf32, #tpu.memory_space<vmem>>, %arg3: memref<3x32x64xf32, #tpu.memory_space<vmem>>, %arg4: memref<24x32xf32, #tpu.memory_space<vmem>>, %arg5: memref<16x32xf32, #tpu.memory_space<vmem>>, %arg6: memref<16x32xf32, #tpu.memory_space<vmem>>) attributes {dimension_semantics = [], scalar_prefetch = 0 : i64, scratch_operands = 0 : i64, tpu.core_type = #tpu.core_type<tc>} {
    %0 = tpu.iota {dimensions = array<i32: 1>} : vector<1x32xi32>
    %c0_i32 = arith.constant 0 : i32
    %1 = vector.broadcast %c0_i32 : i32 to vector<1x32xi32>
    %2 = arith.cmpi sge, %0, %1 : vector<1x32xi32>
    %c8_i32 = arith.constant 8 : i32
    %3 = vector.broadcast %c8_i32 : i32 to vector<1x32xi32>
    %4 = arith.cmpi slt, %0, %3 : vector<1x32xi32>
    %5 = arith.andi %2, %4 : vector<1x32xi1>
    %6 = arith.extui %5 : vector<1x32xi1> to vector<1x32xi32>
    %7 = arith.sitofp %6 : vector<1x32xi32> to vector<1x32xf32>
    %8 = arith.truncf %7 : vector<1x32xf32> to vector<1x32xbf16>
    %c8_i32_0 = arith.constant 8 : i32
    %9 = vector.broadcast %c8_i32_0 : i32 to vector<1x32xi32>
    %10 = arith.cmpi sge, %0, %9 : vector<1x32xi32>
    %c16_i32 = arith.constant 16 : i32
    %11 = vector.broadcast %c16_i32 : i32 to vector<1x32xi32>
    %12 = arith.cmpi slt, %0, %11 : vector<1x32xi32>
    %13 = arith.andi %10, %12 : vector<1x32xi1>
    %14 = arith.extui %13 : vector<1x32xi1> to vector<1x32xi32>
    %15 = arith.sitofp %14 : vector<1x32xi32> to vector<1x32xf32>
    %16 = arith.truncf %15 : vector<1x32xf32> to vector<1x32xbf16>
    %c16_i32_1 = arith.constant 16 : i32
    %17 = vector.broadcast %c16_i32_1 : i32 to vector<1x32xi32>
    %18 = arith.cmpi sge, %0, %17 : vector<1x32xi32>
    %c24_i32 = arith.constant 24 : i32
    %19 = vector.broadcast %c24_i32 : i32 to vector<1x32xi32>
    %20 = arith.cmpi slt, %0, %19 : vector<1x32xi32>
    %21 = arith.andi %18, %20 : vector<1x32xi1>
    %22 = arith.extui %21 : vector<1x32xi1> to vector<1x32xi32>
    %23 = arith.sitofp %22 : vector<1x32xi32> to vector<1x32xf32>
    %24 = arith.truncf %23 : vector<1x32xf32> to vector<1x32xbf16>
    %c24_i32_2 = arith.constant 24 : i32
    %25 = vector.broadcast %c24_i32_2 : i32 to vector<1x32xi32>
    %26 = arith.cmpi sge, %0, %25 : vector<1x32xi32>
    %c32_i32 = arith.constant 32 : i32
    %27 = vector.broadcast %c32_i32 : i32 to vector<1x32xi32>
    %28 = arith.cmpi slt, %0, %27 : vector<1x32xi32>
    %29 = arith.andi %26, %28 : vector<1x32xi1>
    %30 = arith.extui %29 : vector<1x32xi1> to vector<1x32xi32>
    %31 = arith.sitofp %30 : vector<1x32xi32> to vector<1x32xf32>
    %32 = arith.truncf %31 : vector<1x32xf32> to vector<1x32xbf16>
    %33 = tpu.iota {dimensions = array<i32: 0>} : vector<16x16xi32>
    %34 = tpu.iota {dimensions = array<i32: 1>} : vector<16x16xi32>
    %c0_i32_3 = arith.constant 0 : i32
    %35 = vector.broadcast %c0_i32_3 : i32 to vector<16x16xi32>
    %36 = arith.cmpi sge, %33, %35 : vector<16x16xi32>
    %c8_i32_4 = arith.constant 8 : i32
    %37 = vector.broadcast %c8_i32_4 : i32 to vector<16x16xi32>
    %38 = arith.cmpi slt, %33, %37 : vector<16x16xi32>
    %39 = arith.andi %36, %38 : vector<16x16xi1>
    %c0_i32_5 = arith.constant 0 : i32
    %40 = vector.broadcast %c0_i32_5 : i32 to vector<16x16xi32>
    %41 = arith.cmpi sge, %34, %40 : vector<16x16xi32>
    %42 = arith.andi %39, %41 : vector<16x16xi1>
    %c8_i32_6 = arith.constant 8 : i32
    %43 = vector.broadcast %c8_i32_6 : i32 to vector<16x16xi32>
    %44 = arith.cmpi slt, %34, %43 : vector<16x16xi32>
    %45 = arith.andi %42, %44 : vector<16x16xi1>
    %c8_i32_7 = arith.constant 8 : i32
    %46 = vector.broadcast %c8_i32_7 : i32 to vector<16x16xi32>
    %47 = arith.cmpi sge, %33, %46 : vector<16x16xi32>
    %c16_i32_8 = arith.constant 16 : i32
    %48 = vector.broadcast %c16_i32_8 : i32 to vector<16x16xi32>
    %49 = arith.cmpi slt, %33, %48 : vector<16x16xi32>
    %50 = arith.andi %47, %49 : vector<16x16xi1>
    %c8_i32_9 = arith.constant 8 : i32
    %51 = vector.broadcast %c8_i32_9 : i32 to vector<16x16xi32>
    %52 = arith.cmpi sge, %34, %51 : vector<16x16xi32>
    %53 = arith.andi %50, %52 : vector<16x16xi1>
    %c16_i32_10 = arith.constant 16 : i32
    %54 = vector.broadcast %c16_i32_10 : i32 to vector<16x16xi32>
    %55 = arith.cmpi slt, %34, %54 : vector<16x16xi32>
    %56 = arith.andi %53, %55 : vector<16x16xi1>
    %57 = arith.ori %45, %56 : vector<16x16xi1>
    %cst = arith.constant 0.000000e+00 : f32
    %cst_11 = arith.constant -1.000000e+30 : f32
    %58 = vector.broadcast %cst : f32 to vector<16x16xf32>
    %59 = vector.broadcast %cst_11 : f32 to vector<16x16xf32>
    %60 = arith.select %57, %58, %59 : vector<16x16xi1>, vector<16x16xf32>
    %61 = tpu.iota {dimensions = array<i32: 1>} : vector<1x8x1xi32>
    %c0 = arith.constant 0 : index
    %c0_12 = arith.constant 0 : index
    %62 = vector.load %arg0[%c0, %c0_12] : memref<16x32xf32, #tpu.memory_space<vmem>>, vector<16x32xf32>
    %c0_13 = arith.constant 0 : index
    %c0_14 = arith.constant 0 : index
    %63 = vector.load %arg1[%c0_13, %c0_14] : memref<16x32xf32, #tpu.memory_space<vmem>>, vector<16x32xf32>
    %cst_15 = arith.constant 0.000000e+00 : f32
    %64 = vector.broadcast %cst_15 : f32 to vector<2x8x32xf32>
    %c0_16 = arith.constant 0 : index
    %c0_17 = arith.constant 0 : index
    %c0_18 = arith.constant 0 : index
    %65 = vector.load %arg2[%c0_16, %c0_17, %c0_18] : memref<10x32x32xf32, #tpu.memory_space<vmem>>, vector<1x32x32xf32>
    %66 = vector.shape_cast %65 : vector<1x32x32xf32> to vector<32x32xf32>
    %67 = arith.truncf %62 : vector<16x32xf32> to vector<16x32xbf16>
    %68 = arith.truncf %66 : vector<32x32xf32> to vector<32x32xbf16>
    %cst_19 = arith.constant dense<0.000000e+00> : vector<16x32xf32>
    %69 = tpu.matmul %67, %68, %cst_19 {dimension_numbers = #tpu.dot_dimension_numbers<[1], [0], [0], [1], [0, 0, 1, 1], [], []>} : vector<16x32xbf16>, vector<32x32xbf16>, vector<16x32xf32> -> vector<16x32xf32>
    %c2_i32 = arith.constant 2 : i32
    %70 = tpu.dynamic_rotate %69 by %c2_i32 dim 0 : vector<16x32xf32>, i32 -> vector<16x32xf32>
    %c-2_i32 = arith.constant -2 : i32
    %71 = vector.broadcast %c-2_i32 : i32 to vector<1x8x1xi32>
    %72 = arith.addi %61, %71 : vector<1x8x1xi32>
    %c0_i32_20 = arith.constant 0 : i32
    %73 = vector.broadcast %c0_i32_20 : i32 to vector<1x8x1xi32>
    %74 = arith.cmpi sge, %72, %73 : vector<1x8x1xi32>
    %c-2_i32_21 = arith.constant -2 : i32
    %75 = vector.broadcast %c-2_i32_21 : i32 to vector<1x8x1xi32>
    %76 = arith.addi %61, %75 : vector<1x8x1xi32>
    %c8_i32_22 = arith.constant 8 : i32
    %77 = vector.broadcast %c8_i32_22 : i32 to vector<1x8x1xi32>
    %78 = arith.cmpi slt, %76, %77 : vector<1x8x1xi32>
    %79 = arith.andi %74, %78 : vector<1x8x1xi1>
    %80 = arith.extui %79 : vector<1x8x1xi1> to vector<1x8x1xi32>
    %81 = arith.sitofp %80 : vector<1x8x1xi32> to vector<1x8x1xf32>
    %82 = vector.shape_cast %70 : vector<16x32xf32> to vector<2x8x32xf32>
    %83 = vector.broadcast %81 : vector<1x8x1xf32> to vector<2x8x32xf32>
    %84 = arith.mulf %82, %83 : vector<2x8x32xf32>
    %85 = arith.addf %64, %84 : vector<2x8x32xf32>
    %c1 = arith.constant 1 : index
    %c0_23 = arith.constant 0 : index
    %c0_24 = arith.constant 0 : index
    %86 = vector.load %arg2[%c1, %c0_23, %c0_24] : memref<10x32x32xf32, #tpu.memory_space<vmem>>, vector<1x32x32xf32>
    %87 = vector.shape_cast %86 : vector<1x32x32xf32> to vector<32x32xf32>
    %88 = arith.truncf %62 : vector<16x32xf32> to vector<16x32xbf16>
    %89 = arith.truncf %87 : vector<32x32xf32> to vector<32x32xbf16>
    %cst_25 = arith.constant dense<0.000000e+00> : vector<16x32xf32>
    %90 = tpu.matmul %88, %89, %cst_25 {dimension_numbers = #tpu.dot_dimension_numbers<[1], [0], [0], [1], [0, 0, 1, 1], [], []>} : vector<16x32xbf16>, vector<32x32xbf16>, vector<16x32xf32> -> vector<16x32xf32>
    %c0_i32_26 = arith.constant 0 : i32
    %91 = vector.broadcast %c0_i32_26 : i32 to vector<1x8x1xi32>
    %92 = arith.addi %61, %91 : vector<1x8x1xi32>
    %c0_i32_27 = arith.constant 0 : i32
    %93 = vector.broadcast %c0_i32_27 : i32 to vector<1x8x1xi32>
    %94 = arith.cmpi sge, %92, %93 : vector<1x8x1xi32>
    %c0_i32_28 = arith.constant 0 : i32
    %95 = vector.broadcast %c0_i32_28 : i32 to vector<1x8x1xi32>
    %96 = arith.addi %61, %95 : vector<1x8x1xi32>
    %c8_i32_29 = arith.constant 8 : i32
    %97 = vector.broadcast %c8_i32_29 : i32 to vector<1x8x1xi32>
    %98 = arith.cmpi slt, %96, %97 : vector<1x8x1xi32>
    %99 = arith.andi %94, %98 : vector<1x8x1xi1>
    %100 = arith.extui %99 : vector<1x8x1xi1> to vector<1x8x1xi32>
    %101 = arith.sitofp %100 : vector<1x8x1xi32> to vector<1x8x1xf32>
    %102 = vector.shape_cast %90 : vector<16x32xf32> to vector<2x8x32xf32>
    %103 = vector.broadcast %101 : vector<1x8x1xf32> to vector<2x8x32xf32>
    %104 = arith.mulf %102, %103 : vector<2x8x32xf32>
    %105 = arith.addf %85, %104 : vector<2x8x32xf32>
    %c2 = arith.constant 2 : index
    %c0_30 = arith.constant 0 : index
    %c0_31 = arith.constant 0 : index
    %106 = vector.load %arg2[%c2, %c0_30, %c0_31] : memref<10x32x32xf32, #tpu.memory_space<vmem>>, vector<1x32x32xf32>
    %107 = vector.shape_cast %106 : vector<1x32x32xf32> to vector<32x32xf32>
    %108 = arith.truncf %62 : vector<16x32xf32> to vector<16x32xbf16>
    %109 = arith.truncf %107 : vector<32x32xf32> to vector<32x32xbf16>
    %cst_32 = arith.constant dense<0.000000e+00> : vector<16x32xf32>
    %110 = tpu.matmul %108, %109, %cst_32 {dimension_numbers = #tpu.dot_dimension_numbers<[1], [0], [0], [1], [0, 0, 1, 1], [], []>} : vector<16x32xbf16>, vector<32x32xbf16>, vector<16x32xf32> -> vector<16x32xf32>
    %c14_i32 = arith.constant 14 : i32
    %111 = tpu.dynamic_rotate %110 by %c14_i32 dim 0 : vector<16x32xf32>, i32 -> vector<16x32xf32>
    %c2_i32_33 = arith.constant 2 : i32
    %112 = vector.broadcast %c2_i32_33 : i32 to vector<1x8x1xi32>
    %113 = arith.addi %61, %112 : vector<1x8x1xi32>
    %c0_i32_34 = arith.constant 0 : i32
    %114 = vector.broadcast %c0_i32_34 : i32 to vector<1x8x1xi32>
    %115 = arith.cmpi sge, %113, %114 : vector<1x8x1xi32>
    %c2_i32_35 = arith.constant 2 : i32
    %116 = vector.broadcast %c2_i32_35 : i32 to vector<1x8x1xi32>
    %117 = arith.addi %61, %116 : vector<1x8x1xi32>
    %c8_i32_36 = arith.constant 8 : i32
    %118 = vector.broadcast %c8_i32_36 : i32 to vector<1x8x1xi32>
    %119 = arith.cmpi slt, %117, %118 : vector<1x8x1xi32>
    %120 = arith.andi %115, %119 : vector<1x8x1xi1>
    %121 = arith.extui %120 : vector<1x8x1xi1> to vector<1x8x1xi32>
    %122 = arith.sitofp %121 : vector<1x8x1xi32> to vector<1x8x1xf32>
    %123 = vector.shape_cast %111 : vector<16x32xf32> to vector<2x8x32xf32>
    %124 = vector.broadcast %122 : vector<1x8x1xf32> to vector<2x8x32xf32>
    %125 = arith.mulf %123, %124 : vector<2x8x32xf32>
    %126 = arith.addf %105, %125 : vector<2x8x32xf32>
    %127 = vector.shape_cast %126 : vector<2x8x32xf32> to vector<16x32xf32>
    %c0_37 = arith.constant 0 : index
    %c0_38 = arith.constant 0 : index
    %128 = vector.load %arg4[%c0_37, %c0_38] : memref<24x32xf32, #tpu.memory_space<vmem>>, vector<1x32xf32>
    %129 = vector.broadcast %128 : vector<1x32xf32> to vector<16x32xf32>
    %130 = arith.addf %127, %129 : vector<16x32xf32>
    %cst_39 = arith.constant 0.000000e+00 : f32
    %131 = vector.broadcast %cst_39 : f32 to vector<16x32xf32>
    %132 = arith.maximumf %130, %131 : vector<16x32xf32>
    %c1_40 = arith.constant 1 : index
    %c0_41 = arith.constant 0 : index
    %133 = vector.load %arg4[%c1_40, %c0_41] : memref<24x32xf32, #tpu.memory_space<vmem>>, vector<1x32xf32>
    %c6 = arith.constant 6 : index
    %c0_42 = arith.constant 0 : index
    %134 = vector.load %arg4[%c6, %c0_42] : memref<24x32xf32, #tpu.memory_space<vmem>>, vector<1x32xf32>
    %cst_43 = arith.constant dense<0.000000e+00> : vector<16xf32>
    %135 = vector.multi_reduction <add>, %132, %cst_43 [1] : vector<16x32xf32> to vector<16xf32>
    %136 = vector.shape_cast %135 : vector<16xf32> to vector<16x1xf32>
    %cst_44 = arith.constant 3.200000e+01 : f32
    %137 = vector.broadcast %cst_44 : f32 to vector<16x1xf32>
    %138 = arith.divf %136, %137 : vector<16x1xf32>
    %139 = vector.broadcast %138 : vector<16x1xf32> to vector<16x32xf32>
    %140 = arith.subf %132, %139 : vector<16x32xf32>
    %141 = arith.mulf %140, %140 : vector<16x32xf32>
    %cst_45 = arith.constant dense<0.000000e+00> : vector<16xf32>
    %142 = vector.multi_reduction <add>, %141, %cst_45 [1] : vector<16x32xf32> to vector<16xf32>
    %143 = vector.shape_cast %142 : vector<16xf32> to vector<16x1xf32>
    %cst_46 = arith.constant 3.200000e+01 : f32
    %144 = vector.broadcast %cst_46 : f32 to vector<16x1xf32>
    %145 = arith.divf %143, %144 : vector<16x1xf32>
    %cst_47 = arith.constant 9.99999974E-6 : f32
    %146 = vector.broadcast %cst_47 : f32 to vector<16x1xf32>
    %147 = arith.addf %145, %146 : vector<16x1xf32>
    %148 = math.rsqrt %147 : vector<16x1xf32>
    %149 = vector.broadcast %148 : vector<16x1xf32> to vector<16x32xf32>
    %150 = arith.mulf %140, %149 : vector<16x32xf32>
    %151 = vector.broadcast %133 : vector<1x32xf32> to vector<16x32xf32>
    %152 = arith.mulf %150, %151 : vector<16x32xf32>
    %153 = vector.broadcast %134 : vector<1x32xf32> to vector<16x32xf32>
    %154 = arith.addf %152, %153 : vector<16x32xf32>
    %c3 = arith.constant 3 : index
    %c0_48 = arith.constant 0 : index
    %c0_49 = arith.constant 0 : index
    %155 = vector.load %arg2[%c3, %c0_48, %c0_49] : memref<10x32x32xf32, #tpu.memory_space<vmem>>, vector<1x32x32xf32>
    %156 = vector.shape_cast %155 : vector<1x32x32xf32> to vector<32x32xf32>
    %c4 = arith.constant 4 : index
    %c0_50 = arith.constant 0 : index
    %c0_51 = arith.constant 0 : index
    %157 = vector.load %arg2[%c4, %c0_50, %c0_51] : memref<10x32x32xf32, #tpu.memory_space<vmem>>, vector<1x32x32xf32>
    %158 = vector.shape_cast %157 : vector<1x32x32xf32> to vector<32x32xf32>
    %c12 = arith.constant 12 : index
    %c0_52 = arith.constant 0 : index
    %159 = vector.load %arg4[%c12, %c0_52] : memref<24x32xf32, #tpu.memory_space<vmem>>, vector<1x32xf32>
    %c13 = arith.constant 13 : index
    %c0_53 = arith.constant 0 : index
    %160 = vector.load %arg4[%c13, %c0_53] : memref<24x32xf32, #tpu.memory_space<vmem>>, vector<1x32xf32>
    %c14 = arith.constant 14 : index
    %c0_54 = arith.constant 0 : index
    %161 = vector.load %arg4[%c14, %c0_54] : memref<24x32xf32, #tpu.memory_space<vmem>>, vector<1x32xf32>
    %c15 = arith.constant 15 : index
    %c0_55 = arith.constant 0 : index
    %162 = vector.load %arg4[%c15, %c0_55] : memref<24x32xf32, #tpu.memory_space<vmem>>, vector<1x32xf32>
    %163 = arith.truncf %63 : vector<16x32xf32> to vector<16x32xbf16>
    %164 = arith.truncf %156 : vector<32x32xf32> to vector<32x32xbf16>
    %cst_56 = arith.constant dense<0.000000e+00> : vector<16x32xf32>
    %165 = tpu.matmul %163, %164, %cst_56 {dimension_numbers = #tpu.dot_dimension_numbers<[1], [0], [0], [1], [0, 0, 1, 1], [], []>} : vector<16x32xbf16>, vector<32x32xbf16>, vector<16x32xf32> -> vector<16x32xf32>
    %166 = vector.broadcast %159 : vector<1x32xf32> to vector<16x32xf32>
    %167 = arith.addf %165, %166 : vector<16x32xf32>
    %cst_57 = arith.constant 0.353553385 : f32
    %168 = vector.broadcast %cst_57 : f32 to vector<16x32xf32>
    %169 = arith.mulf %167, %168 : vector<16x32xf32>
    %c0_58 = arith.constant 0 : index
    %c0_59 = arith.constant 0 : index
    %c0_60 = arith.constant 0 : index
    %170 = vector.load %arg3[%c0_58, %c0_59, %c0_60] : memref<3x32x64xf32, #tpu.memory_space<vmem>>, vector<1x32x64xf32>
    %171 = vector.shape_cast %170 : vector<1x32x64xf32> to vector<32x64xf32>
    %172 = arith.truncf %63 : vector<16x32xf32> to vector<16x32xbf16>
    %173 = arith.truncf %171 : vector<32x64xf32> to vector<32x64xbf16>
    %cst_61 = arith.constant dense<0.000000e+00> : vector<16x64xf32>
    %174 = tpu.matmul %172, %173, %cst_61 {dimension_numbers = #tpu.dot_dimension_numbers<[1], [0], [0], [1], [0, 0, 1, 1], [], []>} : vector<16x32xbf16>, vector<32x64xbf16>, vector<16x64xf32> -> vector<16x64xf32>
    %175 = vector.extract_strided_slice %174 {offsets = [0, 0], sizes = [16, 32], strides = [1, 1]} : vector<16x64xf32> to vector<16x32xf32>
    %176 = vector.broadcast %160 : vector<1x32xf32> to vector<16x32xf32>
    %177 = arith.addf %175, %176 : vector<16x32xf32>
    %178 = vector.extract_strided_slice %174 {offsets = [0, 32], sizes = [16, 32], strides = [1, 1]} : vector<16x64xf32> to vector<16x32xf32>
    %179 = vector.broadcast %161 : vector<1x32xf32> to vector<16x32xf32>
    %180 = arith.addf %178, %179 : vector<16x32xf32>
    %181 = arith.truncf %169 : vector<16x32xf32> to vector<16x32xbf16>
    %182 = tpu.transpose %177, [1, 0] : vector<16x32xf32> -> vector<32x16xf32>
    %183 = arith.truncf %182 : vector<32x16xf32> to vector<32x16xbf16>
    %184 = arith.truncf %180 : vector<16x32xf32> to vector<16x32xbf16>
    %cst_62 = arith.constant 0.000000e+00 : f32
    %185 = vector.broadcast %cst_62 : f32 to vector<16x32xf32>
    %186 = vector.broadcast %8 : vector<1x32xbf16> to vector<16x32xbf16>
    %187 = arith.mulf %181, %186 : vector<16x32xbf16>
    %cst_63 = arith.constant dense<0.000000e+00> : vector<16x16xf32>
    %188 = tpu.matmul %187, %183, %cst_63 {dimension_numbers = #tpu.dot_dimension_numbers<[1], [0], [0], [1], [0, 0, 1, 1], [], []>} : vector<16x32xbf16>, vector<32x16xbf16>, vector<16x16xf32> -> vector<16x16xf32>
    %189 = arith.addf %188, %60 : vector<16x16xf32>
    %cst_64 = arith.constant dense<0xFF800000> : vector<16xf32>
    %190 = vector.multi_reduction <maximumf>, %189, %cst_64 [1] : vector<16x16xf32> to vector<16xf32>
    %191 = vector.shape_cast %190 : vector<16xf32> to vector<16x1xf32>
    %192 = vector.broadcast %191 : vector<16x1xf32> to vector<16x16xf32>
    %193 = arith.subf %189, %192 : vector<16x16xf32>
    %194 = math.exp %193 : vector<16x16xf32>
    %cst_65 = arith.constant dense<0.000000e+00> : vector<16xf32>
    %195 = vector.multi_reduction <add>, %194, %cst_65 [1] : vector<16x16xf32> to vector<16xf32>
    %196 = vector.shape_cast %195 : vector<16xf32> to vector<16x1xf32>
    %197 = tpu.reciprocal %196 {approx = true} : vector<16x1xf32> -> vector<16x1xf32>
    %198 = vector.broadcast %197 : vector<16x1xf32> to vector<16x16xf32>
    %199 = arith.mulf %194, %198 : vector<16x16xf32>
    %200 = arith.truncf %199 : vector<16x16xf32> to vector<16x16xbf16>
    %201 = vector.broadcast %8 : vector<1x32xbf16> to vector<16x32xbf16>
    %202 = arith.mulf %184, %201 : vector<16x32xbf16>
    %cst_66 = arith.constant dense<0.000000e+00> : vector<16x32xf32>
    %203 = tpu.matmul %200, %202, %cst_66 {dimension_numbers = #tpu.dot_dimension_numbers<[1], [0], [0], [1], [0, 0, 1, 1], [], []>} : vector<16x16xbf16>, vector<16x32xbf16>, vector<16x32xf32> -> vector<16x32xf32>
    %204 = arith.addf %185, %203 : vector<16x32xf32>
    %205 = vector.broadcast %16 : vector<1x32xbf16> to vector<16x32xbf16>
    %206 = arith.mulf %181, %205 : vector<16x32xbf16>
    %cst_67 = arith.constant dense<0.000000e+00> : vector<16x16xf32>
    %207 = tpu.matmul %206, %183, %cst_67 {dimension_numbers = #tpu.dot_dimension_numbers<[1], [0], [0], [1], [0, 0, 1, 1], [], []>} : vector<16x32xbf16>, vector<32x16xbf16>, vector<16x16xf32> -> vector<16x16xf32>
    %208 = arith.addf %207, %60 : vector<16x16xf32>
    %cst_68 = arith.constant dense<0xFF800000> : vector<16xf32>
    %209 = vector.multi_reduction <maximumf>, %208, %cst_68 [1] : vector<16x16xf32> to vector<16xf32>
    %210 = vector.shape_cast %209 : vector<16xf32> to vector<16x1xf32>
    %211 = vector.broadcast %210 : vector<16x1xf32> to vector<16x16xf32>
    %212 = arith.subf %208, %211 : vector<16x16xf32>
    %213 = math.exp %212 : vector<16x16xf32>
    %cst_69 = arith.constant dense<0.000000e+00> : vector<16xf32>
    %214 = vector.multi_reduction <add>, %213, %cst_69 [1] : vector<16x16xf32> to vector<16xf32>
    %215 = vector.shape_cast %214 : vector<16xf32> to vector<16x1xf32>
    %216 = tpu.reciprocal %215 {approx = true} : vector<16x1xf32> -> vector<16x1xf32>
    %217 = vector.broadcast %216 : vector<16x1xf32> to vector<16x16xf32>
    %218 = arith.mulf %213, %217 : vector<16x16xf32>
    %219 = arith.truncf %218 : vector<16x16xf32> to vector<16x16xbf16>
    %220 = vector.broadcast %16 : vector<1x32xbf16> to vector<16x32xbf16>
    %221 = arith.mulf %184, %220 : vector<16x32xbf16>
    %cst_70 = arith.constant dense<0.000000e+00> : vector<16x32xf32>
    %222 = tpu.matmul %219, %221, %cst_70 {dimension_numbers = #tpu.dot_dimension_numbers<[1], [0], [0], [1], [0, 0, 1, 1], [], []>} : vector<16x16xbf16>, vector<16x32xbf16>, vector<16x32xf32> -> vector<16x32xf32>
    %223 = arith.addf %204, %222 : vector<16x32xf32>
    %224 = vector.broadcast %24 : vector<1x32xbf16> to vector<16x32xbf16>
    %225 = arith.mulf %181, %224 : vector<16x32xbf16>
    %cst_71 = arith.constant dense<0.000000e+00> : vector<16x16xf32>
    %226 = tpu.matmul %225, %183, %cst_71 {dimension_numbers = #tpu.dot_dimension_numbers<[1], [0], [0], [1], [0, 0, 1, 1], [], []>} : vector<16x32xbf16>, vector<32x16xbf16>, vector<16x16xf32> -> vector<16x16xf32>
    %227 = arith.addf %226, %60 : vector<16x16xf32>
    %cst_72 = arith.constant dense<0xFF800000> : vector<16xf32>
    %228 = vector.multi_reduction <maximumf>, %227, %cst_72 [1] : vector<16x16xf32> to vector<16xf32>
    %229 = vector.shape_cast %228 : vector<16xf32> to vector<16x1xf32>
    %230 = vector.broadcast %229 : vector<16x1xf32> to vector<16x16xf32>
    %231 = arith.subf %227, %230 : vector<16x16xf32>
    %232 = math.exp %231 : vector<16x16xf32>
    %cst_73 = arith.constant dense<0.000000e+00> : vector<16xf32>
    %233 = vector.multi_reduction <add>, %232, %cst_73 [1] : vector<16x16xf32> to vector<16xf32>
    %234 = vector.shape_cast %233 : vector<16xf32> to vector<16x1xf32>
    %235 = tpu.reciprocal %234 {approx = true} : vector<16x1xf32> -> vector<16x1xf32>
    %236 = vector.broadcast %235 : vector<16x1xf32> to vector<16x16xf32>
    %237 = arith.mulf %232, %236 : vector<16x16xf32>
    %238 = arith.truncf %237 : vector<16x16xf32> to vector<16x16xbf16>
    %239 = vector.broadcast %24 : vector<1x32xbf16> to vector<16x32xbf16>
    %240 = arith.mulf %184, %239 : vector<16x32xbf16>
    %cst_74 = arith.constant dense<0.000000e+00> : vector<16x32xf32>
    %241 = tpu.matmul %238, %240, %cst_74 {dimension_numbers = #tpu.dot_dimension_numbers<[1], [0], [0], [1], [0, 0, 1, 1], [], []>} : vector<16x16xbf16>, vector<16x32xbf16>, vector<16x32xf32> -> vector<16x32xf32>
    %242 = arith.addf %223, %241 : vector<16x32xf32>
    %243 = vector.broadcast %32 : vector<1x32xbf16> to vector<16x32xbf16>
    %244 = arith.mulf %181, %243 : vector<16x32xbf16>
    %cst_75 = arith.constant dense<0.000000e+00> : vector<16x16xf32>
    %245 = tpu.matmul %244, %183, %cst_75 {dimension_numbers = #tpu.dot_dimension_numbers<[1], [0], [0], [1], [0, 0, 1, 1], [], []>} : vector<16x32xbf16>, vector<32x16xbf16>, vector<16x16xf32> -> vector<16x16xf32>
    %246 = arith.addf %245, %60 : vector<16x16xf32>
    %cst_76 = arith.constant dense<0xFF800000> : vector<16xf32>
    %247 = vector.multi_reduction <maximumf>, %246, %cst_76 [1] : vector<16x16xf32> to vector<16xf32>
    %248 = vector.shape_cast %247 : vector<16xf32> to vector<16x1xf32>
    %249 = vector.broadcast %248 : vector<16x1xf32> to vector<16x16xf32>
    %250 = arith.subf %246, %249 : vector<16x16xf32>
    %251 = math.exp %250 : vector<16x16xf32>
    %cst_77 = arith.constant dense<0.000000e+00> : vector<16xf32>
    %252 = vector.multi_reduction <add>, %251, %cst_77 [1] : vector<16x16xf32> to vector<16xf32>
    %253 = vector.shape_cast %252 : vector<16xf32> to vector<16x1xf32>
    %254 = tpu.reciprocal %253 {approx = true} : vector<16x1xf32> -> vector<16x1xf32>
    %255 = vector.broadcast %254 : vector<16x1xf32> to vector<16x16xf32>
    %256 = arith.mulf %251, %255 : vector<16x16xf32>
    %257 = arith.truncf %256 : vector<16x16xf32> to vector<16x16xbf16>
    %258 = vector.broadcast %32 : vector<1x32xbf16> to vector<16x32xbf16>
    %259 = arith.mulf %184, %258 : vector<16x32xbf16>
    %cst_78 = arith.constant dense<0.000000e+00> : vector<16x32xf32>
    %260 = tpu.matmul %257, %259, %cst_78 {dimension_numbers = #tpu.dot_dimension_numbers<[1], [0], [0], [1], [0, 0, 1, 1], [], []>} : vector<16x16xbf16>, vector<16x32xbf16>, vector<16x32xf32> -> vector<16x32xf32>
    %261 = arith.addf %242, %260 : vector<16x32xf32>
    %262 = arith.truncf %261 : vector<16x32xf32> to vector<16x32xbf16>
    %263 = arith.truncf %158 : vector<32x32xf32> to vector<32x32xbf16>
    %cst_79 = arith.constant dense<0.000000e+00> : vector<16x32xf32>
    %264 = tpu.matmul %262, %263, %cst_79 {dimension_numbers = #tpu.dot_dimension_numbers<[1], [0], [0], [1], [0, 0, 1, 1], [], []>} : vector<16x32xbf16>, vector<32x32xbf16>, vector<16x32xf32> -> vector<16x32xf32>
    %265 = vector.broadcast %162 : vector<1x32xf32> to vector<16x32xf32>
    %266 = arith.addf %264, %265 : vector<16x32xf32>
    %267 = arith.addf %266, %63 : vector<16x32xf32>
    %c2_80 = arith.constant 2 : index
    %c0_81 = arith.constant 0 : index
    %268 = vector.load %arg4[%c2_80, %c0_81] : memref<24x32xf32, #tpu.memory_space<vmem>>, vector<1x32xf32>
    %c7 = arith.constant 7 : index
    %c0_82 = arith.constant 0 : index
    %269 = vector.load %arg4[%c7, %c0_82] : memref<24x32xf32, #tpu.memory_space<vmem>>, vector<1x32xf32>
    %cst_83 = arith.constant dense<0.000000e+00> : vector<16xf32>
    %270 = vector.multi_reduction <add>, %267, %cst_83 [1] : vector<16x32xf32> to vector<16xf32>
    %271 = vector.shape_cast %270 : vector<16xf32> to vector<16x1xf32>
    %cst_84 = arith.constant 3.200000e+01 : f32
    %272 = vector.broadcast %cst_84 : f32 to vector<16x1xf32>
    %273 = arith.divf %271, %272 : vector<16x1xf32>
    %274 = vector.broadcast %273 : vector<16x1xf32> to vector<16x32xf32>
    %275 = arith.subf %267, %274 : vector<16x32xf32>
    %276 = arith.mulf %275, %275 : vector<16x32xf32>
    %cst_85 = arith.constant dense<0.000000e+00> : vector<16xf32>
    %277 = vector.multi_reduction <add>, %276, %cst_85 [1] : vector<16x32xf32> to vector<16xf32>
    %278 = vector.shape_cast %277 : vector<16xf32> to vector<16x1xf32>
    %cst_86 = arith.constant 3.200000e+01 : f32
    %279 = vector.broadcast %cst_86 : f32 to vector<16x1xf32>
    %280 = arith.divf %278, %279 : vector<16x1xf32>
    %cst_87 = arith.constant 9.99999974E-6 : f32
    %281 = vector.broadcast %cst_87 : f32 to vector<16x1xf32>
    %282 = arith.addf %280, %281 : vector<16x1xf32>
    %283 = math.rsqrt %282 : vector<16x1xf32>
    %284 = vector.broadcast %283 : vector<16x1xf32> to vector<16x32xf32>
    %285 = arith.mulf %275, %284 : vector<16x32xf32>
    %286 = vector.broadcast %268 : vector<1x32xf32> to vector<16x32xf32>
    %287 = arith.mulf %285, %286 : vector<16x32xf32>
    %288 = vector.broadcast %269 : vector<1x32xf32> to vector<16x32xf32>
    %289 = arith.addf %287, %288 : vector<16x32xf32>
    %c9 = arith.constant 9 : index
    %c0_88 = arith.constant 0 : index
    %c0_89 = arith.constant 0 : index
    %290 = vector.load %arg2[%c9, %c0_88, %c0_89] : memref<10x32x32xf32, #tpu.memory_space<vmem>>, vector<1x32x32xf32>
    %291 = vector.shape_cast %290 : vector<1x32x32xf32> to vector<32x32xf32>
    %292 = arith.truncf %289 : vector<16x32xf32> to vector<16x32xbf16>
    %293 = arith.truncf %291 : vector<32x32xf32> to vector<32x32xbf16>
    %cst_90 = arith.constant dense<0.000000e+00> : vector<16x32xf32>
    %294 = tpu.matmul %292, %293, %cst_90 {dimension_numbers = #tpu.dot_dimension_numbers<[1], [0], [0], [1], [0, 0, 1, 1], [], []>} : vector<16x32xbf16>, vector<32x32xbf16>, vector<16x32xf32> -> vector<16x32xf32>
    %c11 = arith.constant 11 : index
    %c0_91 = arith.constant 0 : index
    %295 = vector.load %arg4[%c11, %c0_91] : memref<24x32xf32, #tpu.memory_space<vmem>>, vector<1x32xf32>
    %296 = vector.broadcast %295 : vector<1x32xf32> to vector<16x32xf32>
    %297 = arith.addf %294, %296 : vector<16x32xf32>
    %cst_92 = arith.constant 0.000000e+00 : f32
    %298 = vector.broadcast %cst_92 : f32 to vector<16x32xf32>
    %299 = arith.maximumf %297, %298 : vector<16x32xf32>
    %c3_93 = arith.constant 3 : index
    %c0_94 = arith.constant 0 : index
    %300 = vector.load %arg4[%c3_93, %c0_94] : memref<24x32xf32, #tpu.memory_space<vmem>>, vector<1x32xf32>
    %c8 = arith.constant 8 : index
    %c0_95 = arith.constant 0 : index
    %301 = vector.load %arg4[%c8, %c0_95] : memref<24x32xf32, #tpu.memory_space<vmem>>, vector<1x32xf32>
    %cst_96 = arith.constant dense<0.000000e+00> : vector<16xf32>
    %302 = vector.multi_reduction <add>, %299, %cst_96 [1] : vector<16x32xf32> to vector<16xf32>
    %303 = vector.shape_cast %302 : vector<16xf32> to vector<16x1xf32>
    %cst_97 = arith.constant 3.200000e+01 : f32
    %304 = vector.broadcast %cst_97 : f32 to vector<16x1xf32>
    %305 = arith.divf %303, %304 : vector<16x1xf32>
    %306 = vector.broadcast %305 : vector<16x1xf32> to vector<16x32xf32>
    %307 = arith.subf %299, %306 : vector<16x32xf32>
    %308 = arith.mulf %307, %307 : vector<16x32xf32>
    %cst_98 = arith.constant dense<0.000000e+00> : vector<16xf32>
    %309 = vector.multi_reduction <add>, %308, %cst_98 [1] : vector<16x32xf32> to vector<16xf32>
    %310 = vector.shape_cast %309 : vector<16xf32> to vector<16x1xf32>
    %cst_99 = arith.constant 3.200000e+01 : f32
    %311 = vector.broadcast %cst_99 : f32 to vector<16x1xf32>
    %312 = arith.divf %310, %311 : vector<16x1xf32>
    %cst_100 = arith.constant 9.99999974E-6 : f32
    %313 = vector.broadcast %cst_100 : f32 to vector<16x1xf32>
    %314 = arith.addf %312, %313 : vector<16x1xf32>
    %315 = math.rsqrt %314 : vector<16x1xf32>
    %316 = vector.broadcast %315 : vector<16x1xf32> to vector<16x32xf32>
    %317 = arith.mulf %307, %316 : vector<16x32xf32>
    %318 = vector.broadcast %300 : vector<1x32xf32> to vector<16x32xf32>
    %319 = arith.mulf %317, %318 : vector<16x32xf32>
    %320 = vector.broadcast %301 : vector<1x32xf32> to vector<16x32xf32>
    %321 = arith.addf %319, %320 : vector<16x32xf32>
    %322 = arith.addf %321, %289 : vector<16x32xf32>
    %c5 = arith.constant 5 : index
    %c0_101 = arith.constant 0 : index
    %c0_102 = arith.constant 0 : index
    %323 = vector.load %arg2[%c5, %c0_101, %c0_102] : memref<10x32x32xf32, #tpu.memory_space<vmem>>, vector<1x32x32xf32>
    %324 = vector.shape_cast %323 : vector<1x32x32xf32> to vector<32x32xf32>
    %c6_103 = arith.constant 6 : index
    %c0_104 = arith.constant 0 : index
    %c0_105 = arith.constant 0 : index
    %325 = vector.load %arg2[%c6_103, %c0_104, %c0_105] : memref<10x32x32xf32, #tpu.memory_space<vmem>>, vector<1x32x32xf32>
    %326 = vector.shape_cast %325 : vector<1x32x32xf32> to vector<32x32xf32>
    %c16 = arith.constant 16 : index
    %c0_106 = arith.constant 0 : index
    %327 = vector.load %arg4[%c16, %c0_106] : memref<24x32xf32, #tpu.memory_space<vmem>>, vector<1x32xf32>
    %c17 = arith.constant 17 : index
    %c0_107 = arith.constant 0 : index
    %328 = vector.load %arg4[%c17, %c0_107] : memref<24x32xf32, #tpu.memory_space<vmem>>, vector<1x32xf32>
    %c18 = arith.constant 18 : index
    %c0_108 = arith.constant 0 : index
    %329 = vector.load %arg4[%c18, %c0_108] : memref<24x32xf32, #tpu.memory_space<vmem>>, vector<1x32xf32>
    %c19 = arith.constant 19 : index
    %c0_109 = arith.constant 0 : index
    %330 = vector.load %arg4[%c19, %c0_109] : memref<24x32xf32, #tpu.memory_space<vmem>>, vector<1x32xf32>
    %331 = arith.truncf %322 : vector<16x32xf32> to vector<16x32xbf16>
    %332 = arith.truncf %324 : vector<32x32xf32> to vector<32x32xbf16>
    %cst_110 = arith.constant dense<0.000000e+00> : vector<16x32xf32>
    %333 = tpu.matmul %331, %332, %cst_110 {dimension_numbers = #tpu.dot_dimension_numbers<[1], [0], [0], [1], [0, 0, 1, 1], [], []>} : vector<16x32xbf16>, vector<32x32xbf16>, vector<16x32xf32> -> vector<16x32xf32>
    %334 = vector.broadcast %327 : vector<1x32xf32> to vector<16x32xf32>
    %335 = arith.addf %333, %334 : vector<16x32xf32>
    %cst_111 = arith.constant 0.353553385 : f32
    %336 = vector.broadcast %cst_111 : f32 to vector<16x32xf32>
    %337 = arith.mulf %335, %336 : vector<16x32xf32>
    %c1_112 = arith.constant 1 : index
    %c0_113 = arith.constant 0 : index
    %c0_114 = arith.constant 0 : index
    %338 = vector.load %arg3[%c1_112, %c0_113, %c0_114] : memref<3x32x64xf32, #tpu.memory_space<vmem>>, vector<1x32x64xf32>
    %339 = vector.shape_cast %338 : vector<1x32x64xf32> to vector<32x64xf32>
    %340 = arith.truncf %154 : vector<16x32xf32> to vector<16x32xbf16>
    %341 = arith.truncf %339 : vector<32x64xf32> to vector<32x64xbf16>
    %cst_115 = arith.constant dense<0.000000e+00> : vector<16x64xf32>
    %342 = tpu.matmul %340, %341, %cst_115 {dimension_numbers = #tpu.dot_dimension_numbers<[1], [0], [0], [1], [0, 0, 1, 1], [], []>} : vector<16x32xbf16>, vector<32x64xbf16>, vector<16x64xf32> -> vector<16x64xf32>
    %343 = vector.extract_strided_slice %342 {offsets = [0, 0], sizes = [16, 32], strides = [1, 1]} : vector<16x64xf32> to vector<16x32xf32>
    %344 = vector.broadcast %328 : vector<1x32xf32> to vector<16x32xf32>
    %345 = arith.addf %343, %344 : vector<16x32xf32>
    %346 = vector.extract_strided_slice %342 {offsets = [0, 32], sizes = [16, 32], strides = [1, 1]} : vector<16x64xf32> to vector<16x32xf32>
    %347 = vector.broadcast %329 : vector<1x32xf32> to vector<16x32xf32>
    %348 = arith.addf %346, %347 : vector<16x32xf32>
    %349 = arith.truncf %337 : vector<16x32xf32> to vector<16x32xbf16>
    %350 = tpu.transpose %345, [1, 0] : vector<16x32xf32> -> vector<32x16xf32>
    %351 = arith.truncf %350 : vector<32x16xf32> to vector<32x16xbf16>
    %352 = arith.truncf %348 : vector<16x32xf32> to vector<16x32xbf16>
    %cst_116 = arith.constant 0.000000e+00 : f32
    %353 = vector.broadcast %cst_116 : f32 to vector<16x32xf32>
    %354 = vector.broadcast %8 : vector<1x32xbf16> to vector<16x32xbf16>
    %355 = arith.mulf %349, %354 : vector<16x32xbf16>
    %cst_117 = arith.constant dense<0.000000e+00> : vector<16x16xf32>
    %356 = tpu.matmul %355, %351, %cst_117 {dimension_numbers = #tpu.dot_dimension_numbers<[1], [0], [0], [1], [0, 0, 1, 1], [], []>} : vector<16x32xbf16>, vector<32x16xbf16>, vector<16x16xf32> -> vector<16x16xf32>
    %357 = arith.addf %356, %60 : vector<16x16xf32>
    %cst_118 = arith.constant dense<0xFF800000> : vector<16xf32>
    %358 = vector.multi_reduction <maximumf>, %357, %cst_118 [1] : vector<16x16xf32> to vector<16xf32>
    %359 = vector.shape_cast %358 : vector<16xf32> to vector<16x1xf32>
    %360 = vector.broadcast %359 : vector<16x1xf32> to vector<16x16xf32>
    %361 = arith.subf %357, %360 : vector<16x16xf32>
    %362 = math.exp %361 : vector<16x16xf32>
    %cst_119 = arith.constant dense<0.000000e+00> : vector<16xf32>
    %363 = vector.multi_reduction <add>, %362, %cst_119 [1] : vector<16x16xf32> to vector<16xf32>
    %364 = vector.shape_cast %363 : vector<16xf32> to vector<16x1xf32>
    %365 = tpu.reciprocal %364 {approx = true} : vector<16x1xf32> -> vector<16x1xf32>
    %366 = vector.broadcast %365 : vector<16x1xf32> to vector<16x16xf32>
    %367 = arith.mulf %362, %366 : vector<16x16xf32>
    %368 = arith.truncf %367 : vector<16x16xf32> to vector<16x16xbf16>
    %369 = vector.broadcast %8 : vector<1x32xbf16> to vector<16x32xbf16>
    %370 = arith.mulf %352, %369 : vector<16x32xbf16>
    %cst_120 = arith.constant dense<0.000000e+00> : vector<16x32xf32>
    %371 = tpu.matmul %368, %370, %cst_120 {dimension_numbers = #tpu.dot_dimension_numbers<[1], [0], [0], [1], [0, 0, 1, 1], [], []>} : vector<16x16xbf16>, vector<16x32xbf16>, vector<16x32xf32> -> vector<16x32xf32>
    %372 = arith.addf %353, %371 : vector<16x32xf32>
    %373 = vector.broadcast %16 : vector<1x32xbf16> to vector<16x32xbf16>
    %374 = arith.mulf %349, %373 : vector<16x32xbf16>
    %cst_121 = arith.constant dense<0.000000e+00> : vector<16x16xf32>
    %375 = tpu.matmul %374, %351, %cst_121 {dimension_numbers = #tpu.dot_dimension_numbers<[1], [0], [0], [1], [0, 0, 1, 1], [], []>} : vector<16x32xbf16>, vector<32x16xbf16>, vector<16x16xf32> -> vector<16x16xf32>
    %376 = arith.addf %375, %60 : vector<16x16xf32>
    %cst_122 = arith.constant dense<0xFF800000> : vector<16xf32>
    %377 = vector.multi_reduction <maximumf>, %376, %cst_122 [1] : vector<16x16xf32> to vector<16xf32>
    %378 = vector.shape_cast %377 : vector<16xf32> to vector<16x1xf32>
    %379 = vector.broadcast %378 : vector<16x1xf32> to vector<16x16xf32>
    %380 = arith.subf %376, %379 : vector<16x16xf32>
    %381 = math.exp %380 : vector<16x16xf32>
    %cst_123 = arith.constant dense<0.000000e+00> : vector<16xf32>
    %382 = vector.multi_reduction <add>, %381, %cst_123 [1] : vector<16x16xf32> to vector<16xf32>
    %383 = vector.shape_cast %382 : vector<16xf32> to vector<16x1xf32>
    %384 = tpu.reciprocal %383 {approx = true} : vector<16x1xf32> -> vector<16x1xf32>
    %385 = vector.broadcast %384 : vector<16x1xf32> to vector<16x16xf32>
    %386 = arith.mulf %381, %385 : vector<16x16xf32>
    %387 = arith.truncf %386 : vector<16x16xf32> to vector<16x16xbf16>
    %388 = vector.broadcast %16 : vector<1x32xbf16> to vector<16x32xbf16>
    %389 = arith.mulf %352, %388 : vector<16x32xbf16>
    %cst_124 = arith.constant dense<0.000000e+00> : vector<16x32xf32>
    %390 = tpu.matmul %387, %389, %cst_124 {dimension_numbers = #tpu.dot_dimension_numbers<[1], [0], [0], [1], [0, 0, 1, 1], [], []>} : vector<16x16xbf16>, vector<16x32xbf16>, vector<16x32xf32> -> vector<16x32xf32>
    %391 = arith.addf %372, %390 : vector<16x32xf32>
    %392 = vector.broadcast %24 : vector<1x32xbf16> to vector<16x32xbf16>
    %393 = arith.mulf %349, %392 : vector<16x32xbf16>
    %cst_125 = arith.constant dense<0.000000e+00> : vector<16x16xf32>
    %394 = tpu.matmul %393, %351, %cst_125 {dimension_numbers = #tpu.dot_dimension_numbers<[1], [0], [0], [1], [0, 0, 1, 1], [], []>} : vector<16x32xbf16>, vector<32x16xbf16>, vector<16x16xf32> -> vector<16x16xf32>
    %395 = arith.addf %394, %60 : vector<16x16xf32>
    %cst_126 = arith.constant dense<0xFF800000> : vector<16xf32>
    %396 = vector.multi_reduction <maximumf>, %395, %cst_126 [1] : vector<16x16xf32> to vector<16xf32>
    %397 = vector.shape_cast %396 : vector<16xf32> to vector<16x1xf32>
    %398 = vector.broadcast %397 : vector<16x1xf32> to vector<16x16xf32>
    %399 = arith.subf %395, %398 : vector<16x16xf32>
    %400 = math.exp %399 : vector<16x16xf32>
    %cst_127 = arith.constant dense<0.000000e+00> : vector<16xf32>
    %401 = vector.multi_reduction <add>, %400, %cst_127 [1] : vector<16x16xf32> to vector<16xf32>
    %402 = vector.shape_cast %401 : vector<16xf32> to vector<16x1xf32>
    %403 = tpu.reciprocal %402 {approx = true} : vector<16x1xf32> -> vector<16x1xf32>
    %404 = vector.broadcast %403 : vector<16x1xf32> to vector<16x16xf32>
    %405 = arith.mulf %400, %404 : vector<16x16xf32>
    %406 = arith.truncf %405 : vector<16x16xf32> to vector<16x16xbf16>
    %407 = vector.broadcast %24 : vector<1x32xbf16> to vector<16x32xbf16>
    %408 = arith.mulf %352, %407 : vector<16x32xbf16>
    %cst_128 = arith.constant dense<0.000000e+00> : vector<16x32xf32>
    %409 = tpu.matmul %406, %408, %cst_128 {dimension_numbers = #tpu.dot_dimension_numbers<[1], [0], [0], [1], [0, 0, 1, 1], [], []>} : vector<16x16xbf16>, vector<16x32xbf16>, vector<16x32xf32> -> vector<16x32xf32>
    %410 = arith.addf %391, %409 : vector<16x32xf32>
    %411 = vector.broadcast %32 : vector<1x32xbf16> to vector<16x32xbf16>
    %412 = arith.mulf %349, %411 : vector<16x32xbf16>
    %cst_129 = arith.constant dense<0.000000e+00> : vector<16x16xf32>
    %413 = tpu.matmul %412, %351, %cst_129 {dimension_numbers = #tpu.dot_dimension_numbers<[1], [0], [0], [1], [0, 0, 1, 1], [], []>} : vector<16x32xbf16>, vector<32x16xbf16>, vector<16x16xf32> -> vector<16x16xf32>
    %414 = arith.addf %413, %60 : vector<16x16xf32>
    %cst_130 = arith.constant dense<0xFF800000> : vector<16xf32>
    %415 = vector.multi_reduction <maximumf>, %414, %cst_130 [1] : vector<16x16xf32> to vector<16xf32>
    %416 = vector.shape_cast %415 : vector<16xf32> to vector<16x1xf32>
    %417 = vector.broadcast %416 : vector<16x1xf32> to vector<16x16xf32>
    %418 = arith.subf %414, %417 : vector<16x16xf32>
    %419 = math.exp %418 : vector<16x16xf32>
    %cst_131 = arith.constant dense<0.000000e+00> : vector<16xf32>
    %420 = vector.multi_reduction <add>, %419, %cst_131 [1] : vector<16x16xf32> to vector<16xf32>
    %421 = vector.shape_cast %420 : vector<16xf32> to vector<16x1xf32>
    %422 = tpu.reciprocal %421 {approx = true} : vector<16x1xf32> -> vector<16x1xf32>
    %423 = vector.broadcast %422 : vector<16x1xf32> to vector<16x16xf32>
    %424 = arith.mulf %419, %423 : vector<16x16xf32>
    %425 = arith.truncf %424 : vector<16x16xf32> to vector<16x16xbf16>
    %426 = vector.broadcast %32 : vector<1x32xbf16> to vector<16x32xbf16>
    %427 = arith.mulf %352, %426 : vector<16x32xbf16>
    %cst_132 = arith.constant dense<0.000000e+00> : vector<16x32xf32>
    %428 = tpu.matmul %425, %427, %cst_132 {dimension_numbers = #tpu.dot_dimension_numbers<[1], [0], [0], [1], [0, 0, 1, 1], [], []>} : vector<16x16xbf16>, vector<16x32xbf16>, vector<16x32xf32> -> vector<16x32xf32>
    %429 = arith.addf %410, %428 : vector<16x32xf32>
    %430 = arith.truncf %429 : vector<16x32xf32> to vector<16x32xbf16>
    %431 = arith.truncf %326 : vector<32x32xf32> to vector<32x32xbf16>
    %cst_133 = arith.constant dense<0.000000e+00> : vector<16x32xf32>
    %432 = tpu.matmul %430, %431, %cst_133 {dimension_numbers = #tpu.dot_dimension_numbers<[1], [0], [0], [1], [0, 0, 1, 1], [], []>} : vector<16x32xbf16>, vector<32x32xbf16>, vector<16x32xf32> -> vector<16x32xf32>
    %433 = vector.broadcast %330 : vector<1x32xf32> to vector<16x32xf32>
    %434 = arith.addf %432, %433 : vector<16x32xf32>
    %435 = arith.addf %434, %322 : vector<16x32xf32>
    %c4_134 = arith.constant 4 : index
    %c0_135 = arith.constant 0 : index
    %436 = vector.load %arg4[%c4_134, %c0_135] : memref<24x32xf32, #tpu.memory_space<vmem>>, vector<1x32xf32>
    %c9_136 = arith.constant 9 : index
    %c0_137 = arith.constant 0 : index
    %437 = vector.load %arg4[%c9_136, %c0_137] : memref<24x32xf32, #tpu.memory_space<vmem>>, vector<1x32xf32>
    %cst_138 = arith.constant dense<0.000000e+00> : vector<16xf32>
    %438 = vector.multi_reduction <add>, %435, %cst_138 [1] : vector<16x32xf32> to vector<16xf32>
    %439 = vector.shape_cast %438 : vector<16xf32> to vector<16x1xf32>
    %cst_139 = arith.constant 3.200000e+01 : f32
    %440 = vector.broadcast %cst_139 : f32 to vector<16x1xf32>
    %441 = arith.divf %439, %440 : vector<16x1xf32>
    %442 = vector.broadcast %441 : vector<16x1xf32> to vector<16x32xf32>
    %443 = arith.subf %435, %442 : vector<16x32xf32>
    %444 = arith.mulf %443, %443 : vector<16x32xf32>
    %cst_140 = arith.constant dense<0.000000e+00> : vector<16xf32>
    %445 = vector.multi_reduction <add>, %444, %cst_140 [1] : vector<16x32xf32> to vector<16xf32>
    %446 = vector.shape_cast %445 : vector<16xf32> to vector<16x1xf32>
    %cst_141 = arith.constant 3.200000e+01 : f32
    %447 = vector.broadcast %cst_141 : f32 to vector<16x1xf32>
    %448 = arith.divf %446, %447 : vector<16x1xf32>
    %cst_142 = arith.constant 9.99999974E-6 : f32
    %449 = vector.broadcast %cst_142 : f32 to vector<16x1xf32>
    %450 = arith.addf %448, %449 : vector<16x1xf32>
    %451 = math.rsqrt %450 : vector<16x1xf32>
    %452 = vector.broadcast %451 : vector<16x1xf32> to vector<16x32xf32>
    %453 = arith.mulf %443, %452 : vector<16x32xf32>
    %454 = vector.broadcast %436 : vector<1x32xf32> to vector<16x32xf32>
    %455 = arith.mulf %453, %454 : vector<16x32xf32>
    %456 = vector.broadcast %437 : vector<1x32xf32> to vector<16x32xf32>
    %457 = arith.addf %455, %456 : vector<16x32xf32>
    %c7_143 = arith.constant 7 : index
    %c0_144 = arith.constant 0 : index
    %c0_145 = arith.constant 0 : index
    %458 = vector.load %arg2[%c7_143, %c0_144, %c0_145] : memref<10x32x32xf32, #tpu.memory_space<vmem>>, vector<1x32x32xf32>
    %459 = vector.shape_cast %458 : vector<1x32x32xf32> to vector<32x32xf32>
    %c8_146 = arith.constant 8 : index
    %c0_147 = arith.constant 0 : index
    %c0_148 = arith.constant 0 : index
    %460 = vector.load %arg2[%c8_146, %c0_147, %c0_148] : memref<10x32x32xf32, #tpu.memory_space<vmem>>, vector<1x32x32xf32>
    %461 = vector.shape_cast %460 : vector<1x32x32xf32> to vector<32x32xf32>
    %c20 = arith.constant 20 : index
    %c0_149 = arith.constant 0 : index
    %462 = vector.load %arg4[%c20, %c0_149] : memref<24x32xf32, #tpu.memory_space<vmem>>, vector<1x32xf32>
    %c21 = arith.constant 21 : index
    %c0_150 = arith.constant 0 : index
    %463 = vector.load %arg4[%c21, %c0_150] : memref<24x32xf32, #tpu.memory_space<vmem>>, vector<1x32xf32>
    %c22 = arith.constant 22 : index
    %c0_151 = arith.constant 0 : index
    %464 = vector.load %arg4[%c22, %c0_151] : memref<24x32xf32, #tpu.memory_space<vmem>>, vector<1x32xf32>
    %c23 = arith.constant 23 : index
    %c0_152 = arith.constant 0 : index
    %465 = vector.load %arg4[%c23, %c0_152] : memref<24x32xf32, #tpu.memory_space<vmem>>, vector<1x32xf32>
    %466 = arith.truncf %154 : vector<16x32xf32> to vector<16x32xbf16>
    %467 = arith.truncf %459 : vector<32x32xf32> to vector<32x32xbf16>
    %cst_153 = arith.constant dense<0.000000e+00> : vector<16x32xf32>
    %468 = tpu.matmul %466, %467, %cst_153 {dimension_numbers = #tpu.dot_dimension_numbers<[1], [0], [0], [1], [0, 0, 1, 1], [], []>} : vector<16x32xbf16>, vector<32x32xbf16>, vector<16x32xf32> -> vector<16x32xf32>
    %469 = vector.broadcast %462 : vector<1x32xf32> to vector<16x32xf32>
    %470 = arith.addf %468, %469 : vector<16x32xf32>
    %cst_154 = arith.constant 0.353553385 : f32
    %471 = vector.broadcast %cst_154 : f32 to vector<16x32xf32>
    %472 = arith.mulf %470, %471 : vector<16x32xf32>
    %c2_155 = arith.constant 2 : index
    %c0_156 = arith.constant 0 : index
    %c0_157 = arith.constant 0 : index
    %473 = vector.load %arg3[%c2_155, %c0_156, %c0_157] : memref<3x32x64xf32, #tpu.memory_space<vmem>>, vector<1x32x64xf32>
    %474 = vector.shape_cast %473 : vector<1x32x64xf32> to vector<32x64xf32>
    %475 = arith.truncf %322 : vector<16x32xf32> to vector<16x32xbf16>
    %476 = arith.truncf %474 : vector<32x64xf32> to vector<32x64xbf16>
    %cst_158 = arith.constant dense<0.000000e+00> : vector<16x64xf32>
    %477 = tpu.matmul %475, %476, %cst_158 {dimension_numbers = #tpu.dot_dimension_numbers<[1], [0], [0], [1], [0, 0, 1, 1], [], []>} : vector<16x32xbf16>, vector<32x64xbf16>, vector<16x64xf32> -> vector<16x64xf32>
    %478 = vector.extract_strided_slice %477 {offsets = [0, 0], sizes = [16, 32], strides = [1, 1]} : vector<16x64xf32> to vector<16x32xf32>
    %479 = vector.broadcast %463 : vector<1x32xf32> to vector<16x32xf32>
    %480 = arith.addf %478, %479 : vector<16x32xf32>
    %481 = vector.extract_strided_slice %477 {offsets = [0, 32], sizes = [16, 32], strides = [1, 1]} : vector<16x64xf32> to vector<16x32xf32>
    %482 = vector.broadcast %464 : vector<1x32xf32> to vector<16x32xf32>
    %483 = arith.addf %481, %482 : vector<16x32xf32>
    %484 = arith.truncf %472 : vector<16x32xf32> to vector<16x32xbf16>
    %485 = tpu.transpose %480, [1, 0] : vector<16x32xf32> -> vector<32x16xf32>
    %486 = arith.truncf %485 : vector<32x16xf32> to vector<32x16xbf16>
    %487 = arith.truncf %483 : vector<16x32xf32> to vector<16x32xbf16>
    %cst_159 = arith.constant 0.000000e+00 : f32
    %488 = vector.broadcast %cst_159 : f32 to vector<16x32xf32>
    %489 = vector.broadcast %8 : vector<1x32xbf16> to vector<16x32xbf16>
    %490 = arith.mulf %484, %489 : vector<16x32xbf16>
    %cst_160 = arith.constant dense<0.000000e+00> : vector<16x16xf32>
    %491 = tpu.matmul %490, %486, %cst_160 {dimension_numbers = #tpu.dot_dimension_numbers<[1], [0], [0], [1], [0, 0, 1, 1], [], []>} : vector<16x32xbf16>, vector<32x16xbf16>, vector<16x16xf32> -> vector<16x16xf32>
    %492 = arith.addf %491, %60 : vector<16x16xf32>
    %cst_161 = arith.constant dense<0xFF800000> : vector<16xf32>
    %493 = vector.multi_reduction <maximumf>, %492, %cst_161 [1] : vector<16x16xf32> to vector<16xf32>
    %494 = vector.shape_cast %493 : vector<16xf32> to vector<16x1xf32>
    %495 = vector.broadcast %494 : vector<16x1xf32> to vector<16x16xf32>
    %496 = arith.subf %492, %495 : vector<16x16xf32>
    %497 = math.exp %496 : vector<16x16xf32>
    %cst_162 = arith.constant dense<0.000000e+00> : vector<16xf32>
    %498 = vector.multi_reduction <add>, %497, %cst_162 [1] : vector<16x16xf32> to vector<16xf32>
    %499 = vector.shape_cast %498 : vector<16xf32> to vector<16x1xf32>
    %500 = tpu.reciprocal %499 {approx = true} : vector<16x1xf32> -> vector<16x1xf32>
    %501 = vector.broadcast %500 : vector<16x1xf32> to vector<16x16xf32>
    %502 = arith.mulf %497, %501 : vector<16x16xf32>
    %503 = arith.truncf %502 : vector<16x16xf32> to vector<16x16xbf16>
    %504 = vector.broadcast %8 : vector<1x32xbf16> to vector<16x32xbf16>
    %505 = arith.mulf %487, %504 : vector<16x32xbf16>
    %cst_163 = arith.constant dense<0.000000e+00> : vector<16x32xf32>
    %506 = tpu.matmul %503, %505, %cst_163 {dimension_numbers = #tpu.dot_dimension_numbers<[1], [0], [0], [1], [0, 0, 1, 1], [], []>} : vector<16x16xbf16>, vector<16x32xbf16>, vector<16x32xf32> -> vector<16x32xf32>
    %507 = arith.addf %488, %506 : vector<16x32xf32>
    %508 = vector.broadcast %16 : vector<1x32xbf16> to vector<16x32xbf16>
    %509 = arith.mulf %484, %508 : vector<16x32xbf16>
    %cst_164 = arith.constant dense<0.000000e+00> : vector<16x16xf32>
    %510 = tpu.matmul %509, %486, %cst_164 {dimension_numbers = #tpu.dot_dimension_numbers<[1], [0], [0], [1], [0, 0, 1, 1], [], []>} : vector<16x32xbf16>, vector<32x16xbf16>, vector<16x16xf32> -> vector<16x16xf32>
    %511 = arith.addf %510, %60 : vector<16x16xf32>
    %cst_165 = arith.constant dense<0xFF800000> : vector<16xf32>
    %512 = vector.multi_reduction <maximumf>, %511, %cst_165 [1] : vector<16x16xf32> to vector<16xf32>
    %513 = vector.shape_cast %512 : vector<16xf32> to vector<16x1xf32>
    %514 = vector.broadcast %513 : vector<16x1xf32> to vector<16x16xf32>
    %515 = arith.subf %511, %514 : vector<16x16xf32>
    %516 = math.exp %515 : vector<16x16xf32>
    %cst_166 = arith.constant dense<0.000000e+00> : vector<16xf32>
    %517 = vector.multi_reduction <add>, %516, %cst_166 [1] : vector<16x16xf32> to vector<16xf32>
    %518 = vector.shape_cast %517 : vector<16xf32> to vector<16x1xf32>
    %519 = tpu.reciprocal %518 {approx = true} : vector<16x1xf32> -> vector<16x1xf32>
    %520 = vector.broadcast %519 : vector<16x1xf32> to vector<16x16xf32>
    %521 = arith.mulf %516, %520 : vector<16x16xf32>
    %522 = arith.truncf %521 : vector<16x16xf32> to vector<16x16xbf16>
    %523 = vector.broadcast %16 : vector<1x32xbf16> to vector<16x32xbf16>
    %524 = arith.mulf %487, %523 : vector<16x32xbf16>
    %cst_167 = arith.constant dense<0.000000e+00> : vector<16x32xf32>
    %525 = tpu.matmul %522, %524, %cst_167 {dimension_numbers = #tpu.dot_dimension_numbers<[1], [0], [0], [1], [0, 0, 1, 1], [], []>} : vector<16x16xbf16>, vector<16x32xbf16>, vector<16x32xf32> -> vector<16x32xf32>
    %526 = arith.addf %507, %525 : vector<16x32xf32>
    %527 = vector.broadcast %24 : vector<1x32xbf16> to vector<16x32xbf16>
    %528 = arith.mulf %484, %527 : vector<16x32xbf16>
    %cst_168 = arith.constant dense<0.000000e+00> : vector<16x16xf32>
    %529 = tpu.matmul %528, %486, %cst_168 {dimension_numbers = #tpu.dot_dimension_numbers<[1], [0], [0], [1], [0, 0, 1, 1], [], []>} : vector<16x32xbf16>, vector<32x16xbf16>, vector<16x16xf32> -> vector<16x16xf32>
    %530 = arith.addf %529, %60 : vector<16x16xf32>
    %cst_169 = arith.constant dense<0xFF800000> : vector<16xf32>
    %531 = vector.multi_reduction <maximumf>, %530, %cst_169 [1] : vector<16x16xf32> to vector<16xf32>
    %532 = vector.shape_cast %531 : vector<16xf32> to vector<16x1xf32>
    %533 = vector.broadcast %532 : vector<16x1xf32> to vector<16x16xf32>
    %534 = arith.subf %530, %533 : vector<16x16xf32>
    %535 = math.exp %534 : vector<16x16xf32>
    %cst_170 = arith.constant dense<0.000000e+00> : vector<16xf32>
    %536 = vector.multi_reduction <add>, %535, %cst_170 [1] : vector<16x16xf32> to vector<16xf32>
    %537 = vector.shape_cast %536 : vector<16xf32> to vector<16x1xf32>
    %538 = tpu.reciprocal %537 {approx = true} : vector<16x1xf32> -> vector<16x1xf32>
    %539 = vector.broadcast %538 : vector<16x1xf32> to vector<16x16xf32>
    %540 = arith.mulf %535, %539 : vector<16x16xf32>
    %541 = arith.truncf %540 : vector<16x16xf32> to vector<16x16xbf16>
    %542 = vector.broadcast %24 : vector<1x32xbf16> to vector<16x32xbf16>
    %543 = arith.mulf %487, %542 : vector<16x32xbf16>
    %cst_171 = arith.constant dense<0.000000e+00> : vector<16x32xf32>
    %544 = tpu.matmul %541, %543, %cst_171 {dimension_numbers = #tpu.dot_dimension_numbers<[1], [0], [0], [1], [0, 0, 1, 1], [], []>} : vector<16x16xbf16>, vector<16x32xbf16>, vector<16x32xf32> -> vector<16x32xf32>
    %545 = arith.addf %526, %544 : vector<16x32xf32>
    %546 = vector.broadcast %32 : vector<1x32xbf16> to vector<16x32xbf16>
    %547 = arith.mulf %484, %546 : vector<16x32xbf16>
    %cst_172 = arith.constant dense<0.000000e+00> : vector<16x16xf32>
    %548 = tpu.matmul %547, %486, %cst_172 {dimension_numbers = #tpu.dot_dimension_numbers<[1], [0], [0], [1], [0, 0, 1, 1], [], []>} : vector<16x32xbf16>, vector<32x16xbf16>, vector<16x16xf32> -> vector<16x16xf32>
    %549 = arith.addf %548, %60 : vector<16x16xf32>
    %cst_173 = arith.constant dense<0xFF800000> : vector<16xf32>
    %550 = vector.multi_reduction <maximumf>, %549, %cst_173 [1] : vector<16x16xf32> to vector<16xf32>
    %551 = vector.shape_cast %550 : vector<16xf32> to vector<16x1xf32>
    %552 = vector.broadcast %551 : vector<16x1xf32> to vector<16x16xf32>
    %553 = arith.subf %549, %552 : vector<16x16xf32>
    %554 = math.exp %553 : vector<16x16xf32>
    %cst_174 = arith.constant dense<0.000000e+00> : vector<16xf32>
    %555 = vector.multi_reduction <add>, %554, %cst_174 [1] : vector<16x16xf32> to vector<16xf32>
    %556 = vector.shape_cast %555 : vector<16xf32> to vector<16x1xf32>
    %557 = tpu.reciprocal %556 {approx = true} : vector<16x1xf32> -> vector<16x1xf32>
    %558 = vector.broadcast %557 : vector<16x1xf32> to vector<16x16xf32>
    %559 = arith.mulf %554, %558 : vector<16x16xf32>
    %560 = arith.truncf %559 : vector<16x16xf32> to vector<16x16xbf16>
    %561 = vector.broadcast %32 : vector<1x32xbf16> to vector<16x32xbf16>
    %562 = arith.mulf %487, %561 : vector<16x32xbf16>
    %cst_175 = arith.constant dense<0.000000e+00> : vector<16x32xf32>
    %563 = tpu.matmul %560, %562, %cst_175 {dimension_numbers = #tpu.dot_dimension_numbers<[1], [0], [0], [1], [0, 0, 1, 1], [], []>} : vector<16x16xbf16>, vector<16x32xbf16>, vector<16x32xf32> -> vector<16x32xf32>
    %564 = arith.addf %545, %563 : vector<16x32xf32>
    %565 = arith.truncf %564 : vector<16x32xf32> to vector<16x32xbf16>
    %566 = arith.truncf %461 : vector<32x32xf32> to vector<32x32xbf16>
    %cst_176 = arith.constant dense<0.000000e+00> : vector<16x32xf32>
    %567 = tpu.matmul %565, %566, %cst_176 {dimension_numbers = #tpu.dot_dimension_numbers<[1], [0], [0], [1], [0, 0, 1, 1], [], []>} : vector<16x32xbf16>, vector<32x32xbf16>, vector<16x32xf32> -> vector<16x32xf32>
    %568 = vector.broadcast %465 : vector<1x32xf32> to vector<16x32xf32>
    %569 = arith.addf %567, %568 : vector<16x32xf32>
    %570 = arith.addf %569, %154 : vector<16x32xf32>
    %c5_177 = arith.constant 5 : index
    %c0_178 = arith.constant 0 : index
    %571 = vector.load %arg4[%c5_177, %c0_178] : memref<24x32xf32, #tpu.memory_space<vmem>>, vector<1x32xf32>
    %c10 = arith.constant 10 : index
    %c0_179 = arith.constant 0 : index
    %572 = vector.load %arg4[%c10, %c0_179] : memref<24x32xf32, #tpu.memory_space<vmem>>, vector<1x32xf32>
    %cst_180 = arith.constant dense<0.000000e+00> : vector<16xf32>
    %573 = vector.multi_reduction <add>, %570, %cst_180 [1] : vector<16x32xf32> to vector<16xf32>
    %574 = vector.shape_cast %573 : vector<16xf32> to vector<16x1xf32>
    %cst_181 = arith.constant 3.200000e+01 : f32
    %575 = vector.broadcast %cst_181 : f32 to vector<16x1xf32>
    %576 = arith.divf %574, %575 : vector<16x1xf32>
    %577 = vector.broadcast %576 : vector<16x1xf32> to vector<16x32xf32>
    %578 = arith.subf %570, %577 : vector<16x32xf32>
    %579 = arith.mulf %578, %578 : vector<16x32xf32>
    %cst_182 = arith.constant dense<0.000000e+00> : vector<16xf32>
    %580 = vector.multi_reduction <add>, %579, %cst_182 [1] : vector<16x32xf32> to vector<16xf32>
    %581 = vector.shape_cast %580 : vector<16xf32> to vector<16x1xf32>
    %cst_183 = arith.constant 3.200000e+01 : f32
    %582 = vector.broadcast %cst_183 : f32 to vector<16x1xf32>
    %583 = arith.divf %581, %582 : vector<16x1xf32>
    %cst_184 = arith.constant 9.99999974E-6 : f32
    %584 = vector.broadcast %cst_184 : f32 to vector<16x1xf32>
    %585 = arith.addf %583, %584 : vector<16x1xf32>
    %586 = math.rsqrt %585 : vector<16x1xf32>
    %587 = vector.broadcast %586 : vector<16x1xf32> to vector<16x32xf32>
    %588 = arith.mulf %578, %587 : vector<16x32xf32>
    %589 = vector.broadcast %571 : vector<1x32xf32> to vector<16x32xf32>
    %590 = arith.mulf %588, %589 : vector<16x32xf32>
    %591 = vector.broadcast %572 : vector<1x32xf32> to vector<16x32xf32>
    %592 = arith.addf %590, %591 : vector<16x32xf32>
    %c0_185 = arith.constant 0 : index
    %c0_186 = arith.constant 0 : index
    %593 = vector.load %arg5[%c0_185, %c0_186] : memref<16x32xf32, #tpu.memory_space<vmem>>, vector<16x32xf32>
    tpu.vector_store %arg5[%c0_185, %c0_186], %592 {strides = array<i32>} : memref<16x32xf32, #tpu.memory_space<vmem>>, vector<16x32xf32>,
    %c0_187 = arith.constant 0 : index
    %c0_188 = arith.constant 0 : index
    %594 = vector.load %arg6[%c0_187, %c0_188] : memref<16x32xf32, #tpu.memory_space<vmem>>, vector<16x32xf32>
    tpu.vector_store %arg6[%c0_187, %c0_188], %457 {strides = array<i32>} : memref<16x32xf32, #tpu.memory_space<vmem>>, vector<16x32xf32>,
    return
  }
}

</mosaic_0001>

<llo_original>
// kernel: timesformer_layer.1
$region0: #{timesformer_layer.1}
  #allocation0 [shape = 'u32[]', space=smem, size = 0x4, offset = 0x4, fixed_abs, tag = 'smem constant byte address 0x4 - core index']
  #allocation1 [shape = 'u32[72,128]{1,0:T(1,128)}', space=vmem, size = 0x9000, scoped, tag = 'internal scratch']
  %s0 = inlined_call_operand.hbm [shape: f32[16,32], index: 0, kind: input, shape index: {}]
  %s1 = inlined_call_operand.hbm [shape: f32[16,32], index: 1, kind: input, shape index: {}]
  %s2 = inlined_call_operand.hbm [shape: f32[10,32,32], index: 2, kind: input, shape index: {}]
  %s3 = inlined_call_operand.hbm [shape: f32[3,32,64], index: 3, kind: input, shape index: {}]
  %s4 = inlined_call_operand.hbm [shape: f32[24,32], index: 4, kind: input, shape index: {}]
  %s5 = inlined_call_operand.hbm [shape: f32[16,32], index: 5, kind: output, shape index: {0}]
  %s6 = inlined_call_operand.hbm [shape: f32[16,32], index: 6, kind: output, shape index: {1}]
  %7 = xla_tuple %s5, %s6
  %s8 = sld [smem:[#allocation0]]
  $region58: #{timesformer_layer.1} parent=0
    _
  %s10 = ssub.s32 1, %s8
  %s11 = scalar_select 0, %s10, %s8
  $region1: #{timesformer_layer.1} parent=0
    #allocation2 [shape = 'u8[8192]{0}', space=vmem, size = 0x2000, scoped, tag = 'input window, operand 0, single buffered']
    #allocation3 [shape = 's32[1]{0}', space=sflag, size = 0x4, scoped, tag = 'scoped memory for timesformer_layer.1']
    #allocation4 [shape = 's32[1]{0}', space=sflag, size = 0x4, scoped, tag = 'scoped memory for timesformer_layer.1']
    #allocation5 [shape = 'u8[8192]{0}', space=vmem, size = 0x2000, scoped, tag = 'input window, operand 1, single buffered']
    #allocation6 [shape = 's32[1]{0}', space=sflag, size = 0x4, scoped, tag = 'scoped memory for timesformer_layer.1']
    #allocation7 [shape = 'u8[163840]{0}', space=vmem, size = 0x28000, scoped, tag = 'input window, operand 2, single buffered']
    #allocation8 [shape = 'u8[49152]{0}', space=vmem, size = 0xc000, scoped, tag = 'input window, operand 3, single buffered']
    #allocation9 [shape = 's32[1]{0}', space=sflag, size = 0x4, scoped, tag = 'scoped memory for timesformer_layer.1']
    #allocation10 [shape = 'u8[12288]{0}', space=vmem, size = 0x3000, scoped, tag = 'input window, operand 4, single buffered']
    #allocation11 [shape = 'u8[8192]{0}', space=vmem, size = 0x2000, scoped, tag = 'output window, operand 0, single buffered']
    #allocation12 [shape = 'u8[8192]{0}', space=vmem, size = 0x2000, scoped, tag = 'output window, operand 1, single buffered']
    #allocation13 [shape = 's32[1]{0}', space=sflag, size = 0x4, scoped, tag = 'scoped memory for timesformer_layer.1']
    %12 = vsyncpa [#allocation3], 0
    %13 = vsyncpa [#allocation6], 0
    %14 = vsyncpa [#allocation9], 0
    %15 = vsyncpa [#allocation4], 0
    %16 = vsyncpa [#allocation13], 0
    // Predicated region
    $region2: #{timesformer_layer.1} parent=1 // pred_check
      _
    $region3: #{timesformer_layer.1} parent=1 // pred_check_branch
      %18 = sbr.rel (0) target = $region5
    $region4: #{timesformer_layer.1} parent=1 // pred_region
      %20 = vsyncadd [#allocation3], 0
      %s21 = sshll.u32 %s0, 4
      %s22 = int_to_ptr.hbm [resolvable:$true] %s21
      %s23 = sshll.u32 [#allocation2], 4
      %s24 = int_to_ptr.vmem [resolvable:$true] %s23
      %29 = dma.hbm_to_vmem [thread:$0]  %s22, 256, %s24, [#allocation3], 128, 128, 8
    $region5: #{timesformer_layer.1} parent=1 // pred_fallthru
      _
    // Predicated region
    $region6: #{timesformer_layer.1} parent=1 // pred_check
      _
    $region7: #{timesformer_layer.1} parent=1 // pred_check_branch
      %31 = sbr.rel (0) target = $region9
    $region8: #{timesformer_layer.1} parent=1 // pred_region
      %33 = vsyncadd [#allocation6], 0
      %s34 = sshll.u32 %s1, 4
      %s35 = int_to_ptr.hbm [resolvable:$true] %s34
      %s36 = sshll.u32 [#allocation5], 4
      %s37 = int_to_ptr.vmem [resolvable:$true] %s36
      %42 = dma.hbm_to_vmem [thread:$0]  %s35, 256, %s37, [#allocation6], 128, 128, 8
    $region9: #{timesformer_layer.1} parent=1 // pred_fallthru
      _
    // Predicated region
    $region10: #{timesformer_layer.1} parent=1 // pred_check
      _
    $region11: #{timesformer_layer.1} parent=1 // pred_check_branch
      %44 = sbr.rel (0) target = $region13
    $region12: #{timesformer_layer.1} parent=1 // pred_region
      %46 = vsyncadd [#allocation6], 0
      %s47 = sshll.u32 %s2, 4
      %s48 = int_to_ptr.hbm [resolvable:$true] %s47
      %s49 = sshll.u32 [#allocation7], 4
      %s50 = int_to_ptr.vmem [resolvable:$true] %s49
      %55 = dma.hbm_to_vmem [thread:$0]  %s48, 5120, %s50, [#allocation6], 128, 128, 8
    $region13: #{timesformer_layer.1} parent=1 // pred_fallthru
      _
    // Predicated region
    $region14: #{timesformer_layer.1} parent=1 // pred_check
      _
    $region15: #{timesformer_layer.1} parent=1 // pred_check_branch
      %57 = sbr.rel (0) target = $region17
    $region16: #{timesformer_layer.1} parent=1 // pred_region
      %59 = vsyncadd [#allocation9], 0
      %s60 = sshll.u32 %s3, 4
      %s61 = int_to_ptr.hbm [resolvable:$true] %s60
      %s62 = sshll.u32 [#allocation8], 4
      %s63 = int_to_ptr.vmem [resolvable:$true] %s62
      %68 = dma.hbm_to_vmem [thread:$0]  %s61, 1536, %s63, [#allocation9], 128, 128, 8
    $region17: #{timesformer_layer.1} parent=1 // pred_fallthru
      _
    // Predicated region
    $region18: #{timesformer_layer.1} parent=1 // pred_check
      _
    $region19: #{timesformer_layer.1} parent=1 // pred_check_branch
      %70 = sbr.rel (0) target = $region21
    $region20: #{timesformer_layer.1} parent=1 // pred_region
      %72 = vsyncadd [#allocation9], 0
      %s73 = sshll.u32 %s4, 4
      %s74 = int_to_ptr.hbm [resolvable:$true] %s73
      %s75 = sshll.u32 [#allocation10], 4
      %s76 = int_to_ptr.vmem [resolvable:$true] %s75
      %81 = dma.hbm_to_vmem [thread:$0]  %s74, 384, %s76, [#allocation9], 128, 128, 8
    $region21: #{timesformer_layer.1} parent=1 // pred_fallthru
      _
    // Predicated region
    $region22: #{timesformer_layer.1} parent=1 // pred_check
      _
    $region23: #{timesformer_layer.1} parent=1 // pred_check_branch
      %83 = sbr.rel (0) target = $region25
    $region24: #{timesformer_layer.1} parent=1 // pred_region
      %85 = dma.done [#allocation3], 256
    $region25: #{timesformer_layer.1} parent=1 // pred_fallthru
      _
    // Predicated region
    $region26: #{timesformer_layer.1} parent=1 // pred_check
      _
    $region27: #{timesformer_layer.1} parent=1 // pred_check_branch
      %87 = sbr.rel (0) target = $region29
    $region28: #{timesformer_layer.1} parent=1 // pred_region
      %89 = dma.done [#allocation6], 256
    $region29: #{timesformer_layer.1} parent=1 // pred_fallthru
      _
    // Predicated region
    $region30: #{timesformer_layer.1} parent=1 // pred_check
      _
    $region31: #{timesformer_layer.1} parent=1 // pred_check_branch
      %91 = sbr.rel (0) target = $region33
    $region32: #{timesformer_layer.1} parent=1 // pred_region
      %93 = dma.done [#allocation6], 5120
    $region33: #{timesformer_layer.1} parent=1 // pred_fallthru
      _
    // Predicated region
    $region34: #{timesformer_layer.1} parent=1 // pred_check
      _
    $region35: #{timesformer_layer.1} parent=1 // pred_check_branch
      %95 = sbr.rel (0) target = $region37
    $region36: #{timesformer_layer.1} parent=1 // pred_region
      %97 = dma.done [#allocation9], 1536
    $region37: #{timesformer_layer.1} parent=1 // pred_fallthru
      _
    // Predicated region
    $region38: #{timesformer_layer.1} parent=1 // pred_check
      _
    $region39: #{timesformer_layer.1} parent=1 // pred_check_branch
      %99 = sbr.rel (0) target = $region41
    $region40: #{timesformer_layer.1} parent=1 // pred_region
      %101 = dma.done [#allocation9], 384
    $region41: #{timesformer_layer.1} parent=1 // pred_fallthru
      _
    %v103 = vlaneseq
    %v104 = vand.u32 %v103, 127
    %vm105 = vcmp.ge.s32.totalorder %v104, 0
    %vm106 = vcmp.lt.s32.totalorder %v104, 8
    %vm107 = vmand %vm105, %vm106
    %v108 = vsel %vm107, 1, 0
    %v109 = vcvt.s32.f32 %v108
    %v110 = vpack.c.bf16 %v109, %v109
    %vm111 = vcmp.ge.s32.totalorder %v104, 8
    %vm112 = vcmp.lt.s32.totalorder %v104, 16
    %vm113 = vmand %vm111, %vm112
    %v114 = vsel %vm113, 1, 0
    %v115 = vcvt.s32.f32 %v114
    %v116 = vpack.c.bf16 %v115, %v115
    %vm117 = vcmp.ge.s32.totalorder %v104, 16
    %vm118 = vcmp.lt.s32.totalorder %v104, 24
    %vm119 = vmand %vm117, %vm118
    %v120 = vsel %vm119, 1, 0
    %v121 = vcvt.s32.f32 %v120
    %v122 = vpack.c.bf16 %v121, %v121
    %vm123 = vcmp.ge.s32.totalorder %v104, 24
    %vm124 = vcmp.lt.s32.totalorder %v104, 32
    %vm125 = vmand %vm123, %vm124
    %v126 = vsel %vm125, 1, 0
    %v127 = vcvt.s32.f32 %v126
    %v128 = vpack.c.bf16 %v127, %v127
    %v129 = vlaneseq
    %v130 = vshrl.u32 %v129, 7
    %v131 = vadd.s32 %v130, 8
    %vm132 = vcmp.ge.s32.totalorder %v130, 0
    %vm133 = vcmp.ge.s32.totalorder %v131, 0
    %vm134 = vcmp.lt.s32.totalorder %v130, 8
    %vm135 = vcmp.lt.s32.totalorder %v131, 8
    %vm136 = vmand %vm132, %vm134
    %vm137 = vmand %vm133, %vm135
    %vm138 = vmand %vm136, %vm105
    %vm139 = vmand %vm137, %vm105
    %vm140 = vmand %vm138, %vm106
    %vm141 = vmand %vm139, %vm106
    %vm142 = vcmp.ge.s32.totalorder %v130, 8
    %vm143 = vcmp.ge.s32.totalorder %v131, 8
    %vm144 = vcmp.lt.s32.totalorder %v130, 16
    %vm145 = vcmp.lt.s32.totalorder %v131, 16
    %vm146 = vmand %vm142, %vm144
    %vm147 = vmand %vm143, %vm145
    %vm148 = vmand %vm146, %vm111
    %vm149 = vmand %vm147, %vm111
    %vm150 = vmand %vm148, %vm112
    %vm151 = vmand %vm149, %vm112
    %vm152 = vmor %vm140, %vm150
    %vm153 = vmor %vm141, %vm151
    %v154 = vsel %vm152, 0.0, -1e+30
    %v155 = vsel %vm153, 0.0, -1e+30
    %v156 = vld [vmem:[#allocation2] sm:$0xff]
    %v157 = vld [vmem:[#allocation2 + $0x8] sm:$0xff]
    %v158 = vld [vmem:[#allocation5] sm:$0xff]
    %v159 = vld [vmem:[#allocation5 + $0x8] sm:$0xff]
    %v160 = vld [vmem:[#allocation7] sm:$0xff]
    %v161 = vld [vmem:[#allocation7 + $0x8] sm:$0xff]
    %v162 = vld [vmem:[#allocation7 + $0x10] sm:$0xff]
    %v163 = vld [vmem:[#allocation7 + $0x18] sm:$0xff]
    %v164 = vpack.c.bf16 %v157, %v156
    %v165 = vpack.c.bf16 %v161, %v160
    %v166 = vpack.c.bf16 %v163, %v162
    %vm167 = vcmask 261120
    %v169 = vsel %vm167, %v164, 0
    %171 = vmatpush.bf16.msra.mxu0 0
    %172 = vmatpush.bf16.msra.mxu0 0
    %173 = vmatpush.bf16.msra.mxu0 0
    %174 = vmatpush.bf16.msra.mxu0 0
    %175 = vmatpush.bf16.msra.mxu0 0
    %176 = vmatpush.bf16.msra.mxu0 0
    %177 = vmatpush.bf16.msra.mxu0 %v166
    %178 = vmatpush.bf16.msra.mxu0 %v165
    %179 = vmatmul.bf16.gmra.mxu0 %v169
    %v180 = vpop.f32.mrf.mxu0
    %v181 = vadd.f32 0.0, %v180
    %v182 = vpop.f32.mrf.mxu0
    %v183 = vadd.f32 0.0, %v182
    %184 = vdwg.mxu0
    %v185 = vrot.slane %v181, 6
    %v186 = vrot.slane %v183, 6
    %vm187 = vcmp.lt.s32.totalorder %v130, 2
    %v188 = vsel %vm187, %v185, %v186
    %v189 = vsel %vm187, %v186, %v185
    %v190 = vadd.s32 %v130, 4294967294
    %vm191 = vcmp.ge.s32.totalorder %v190, 0
    %vm192 = vcmp.lt.s32.totalorder %v190, 8
    %vm193 = vmand %vm191, %vm192
    %v194 = vsel %vm193, 1, 0
    %v195 = vcvt.s32.f32 %v194
    %v196 = vmul.f32 %v189, %v195
    %v197 = vmul.f32 %v188, %v195
    %v198 = vadd.f32 %v196, 0.0
    %v199 = vadd.f32 %v197, 0.0
    %s200 = scalar_lea.vmem [#allocation7], 32
    %v201 = vld [vmem:[%s200] sm:$0xff]
    %v202 = vld [vmem:[%s200 + $0x8] sm:$0xff]
    %v203 = vld [vmem:[%s200 + $0x10] sm:$0xff]
    %v204 = vld [vmem:[%s200 + $0x18] sm:$0xff]
    %v205 = vpack.c.bf16 %v202, %v201
    %v206 = vpack.c.bf16 %v204, %v203
    %207 = vmatpush.bf16.msra.mxu0 0
    %208 = vmatpush.bf16.msra.mxu0 0
    %209 = vmatpush.bf16.msra.mxu0 0
    %210 = vmatpush.bf16.msra.mxu0 0
    %211 = vmatpush.bf16.msra.mxu0 0
    %212 = vmatpush.bf16.msra.mxu0 0
    %213 = vmatpush.bf16.msra.mxu0 %v206
    %214 = vmatpush.bf16.msra.mxu0 %v205
    %215 = vmatmul.bf16.gmra.mxu0 %v169
    %v216 = vpop.f32.mrf.mxu0
    %v217 = vadd.f32 0.0, %v216
    %v218 = vpop.f32.mrf.mxu0
    %v219 = vadd.f32 0.0, %v218
    %220 = vdwg.mxu0
    %v221 = vsel %vm136, 1, 0
    %v222 = vcvt.s32.f32 %v221
    %v223 = vmul.f32 %v217, %v222
    %v224 = vmul.f32 %v219, %v222
    %v225 = vadd.f32 %v198, %v223
    %v226 = vadd.f32 %v199, %v224
    %s227 = scalar_lea.vmem [#allocation7], 64
    %v228 = vld [vmem:[%s227] sm:$0xff]
    %v229 = vld [vmem:[%s227 + $0x8] sm:$0xff]
    %v230 = vld [vmem:[%s227 + $0x10] sm:$0xff]
    %v231 = vld [vmem:[%s227 + $0x18] sm:$0xff]
    %v232 = vpack.c.bf16 %v229, %v228
    %v233 = vpack.c.bf16 %v231, %v230
    %234 = vmatpush.bf16.msra.mxu0 0
    %235 = vmatpush.bf16.msra.mxu0 0
    %236 = vmatpush.bf16.msra.mxu0 0
    %237 = vmatpush.bf16.msra.mxu0 0
    %238 = vmatpush.bf16.msra.mxu0 0
    %239 = vmatpush.bf16.msra.mxu0 0
    %240 = vmatpush.bf16.msra.mxu0 %v233
    %241 = vmatpush.bf16.msra.mxu0 %v232
    %242 = vmatmul.bf16.gmra.mxu0 %v169
    %v243 = vpop.f32.mrf.mxu0
    %v244 = vadd.f32 0.0, %v243
    %v245 = vpop.f32.mrf.mxu0
    %v246 = vadd.f32 0.0, %v245
    %247 = vdwg.mxu0
    %v248 = vrot.slane %v244, 2
    %v249 = vrot.slane %v246, 2
    %vm250 = vcmp.lt.s32.totalorder %v130, 6
    %v251 = vsel %vm250, %v248, %v249
    %v252 = vsel %vm250, %v249, %v248
    %v253 = vadd.s32 %v130, 2
    %vm254 = vcmp.ge.s32.totalorder %v253, 0
    %vm255 = vcmp.lt.s32.totalorder %v253, 8
    %vm256 = vmand %vm254, %vm255
    %v257 = vsel %vm256, 1, 0
    %v258 = vcvt.s32.f32 %v257
    %v259 = vmul.f32 %v251, %v258
    %v260 = vmul.f32 %v252, %v258
    %v261 = vadd.f32 %v225, %v259
    %v262 = vadd.f32 %v226, %v260
    %v263 = vld [vmem:[#allocation10] sm:$0x1]
    %v264 = vperm.slane %v263, 0
    %v265 = vadd.f32 %v261, %v264
    %v266 = vadd.f32 %v262, %v264
    %v267 = vmax.f32 %v265, 0.0
    %v268 = vmax.f32 %v266, 0.0
    %v269 = vld [vmem:[#allocation10 + $0x1] sm:$0x1]
    %v270 = vld [vmem:[#allocation10 + $0x6] sm:$0x1]
    %v271 = vsel %vm167, %v267, 0.0
    %272 = vadd.xlane.f32.xlu0 %v271
    %v273 = vpop.xlane.xlu0 %272
    %v274 = vsel %vm167, %v268, 0.0
    %275 = vadd.xlane.f32.xlu0 %v274
    %v276 = vpop.xlane.xlu0 %275
    %v277 = vrcp.pop 32.0
    %v278 = vmul.f32 32.0, %v277
    %v279 = vsub.f32 1.0, %v278
    %v280 = vmul.f32 %v277, %v279
    %v281 = vadd.f32 %v277, %v280
    %vm282 = vweird.f32 %v277
    %v283 = vsel %vm282, %v277, %v281
    %v284 = vmul.f32 %v273, %v283
    %v285 = vmul.f32 %v276, %v283
    %v286 = vsub.f32 %v267, %v284
    %v287 = vsub.f32 %v268, %v285
    %v288 = vmul.f32 %v286, %v286
    %v289 = vmul.f32 %v287, %v287
    %v290 = vsel %vm167, %v288, 0.0
    %291 = vadd.xlane.f32.xlu0 %v290
    %v292 = vpop.xlane.xlu0 %291
    %v293 = vsel %vm167, %v289, 0.0
    %294 = vadd.xlane.f32.xlu0 %v293
    %v295 = vpop.xlane.xlu0 %294
    %v296 = vmul.f32 %v292, %v283
    %v297 = vmul.f32 %v295, %v283
    %v298 = vadd.f32 %v296, 1e-05
    %v299 = vadd.f32 %v297, 1e-05
    %v300 = vrsqrt.pop %v298
    %v301 = vmul.f32 %v300, %v298
    %v302 = vmul.f32 %v301, %v300
    %v303 = vmul.f32 0.5, %v302
    %v304 = vsub.f32 1.5, %v303
    %v305 = vmul.f32 %v300, %v304
    %vm306 = vweird.f32 %v298
    %vm307 = vweird.f32 %v300
    %vm308 = vmor %vm306, %vm307
    %v309 = vsel %vm308, %v300, %v305
    %v310 = vrsqrt.pop %v299
    %v311 = vmul.f32 %v310, %v299
    %v312 = vmul.f32 %v311, %v310
    %v313 = vmul.f32 0.5, %v312
    %v314 = vsub.f32 1.5, %v313
    %v315 = vmul.f32 %v310, %v314
    %vm316 = vweird.f32 %v299
    %vm317 = vweird.f32 %v310
    %vm318 = vmor %vm316, %vm317
    %v319 = vsel %vm318, %v310, %v315
    %v320 = vmul.f32 %v286, %v309
    %v321 = vmul.f32 %v287, %v319
    %v322 = vperm.slane %v269, 0
    %v323 = vmul.f32 %v320, %v322
    %v324 = vmul.f32 %v321, %v322
    %v325 = vperm.slane %v270, 0
    %v326 = vadd.f32 %v323, %v325
    %v327 = vadd.f32 %v324, %v325
    %s328 = scalar_lea.vmem [#allocation7], 96
    %v329 = vld [vmem:[%s328] sm:$0xff]
    %v330 = vld [vmem:[%s328 + $0x8] sm:$0xff]
    %v331 = vld [vmem:[%s328 + $0x10] sm:$0xff]
    %v332 = vld [vmem:[%s328 + $0x18] sm:$0xff]
    %s333 = scalar_lea.vmem [#allocation7], 128
    %v334 = vld [vmem:[%s333] sm:$0xff]
    %v335 = vld [vmem:[%s333 + $0x8] sm:$0xff]
    %v336 = vld [vmem:[%s333 + $0x10] sm:$0xff]
    %v337 = vld [vmem:[%s333 + $0x18] sm:$0xff]
    %v338 = vld [vmem:[#allocation10 + $0xc] sm:$0x1]
    %v339 = vld [vmem:[#allocation10 + $0xd] sm:$0x1]
    %v340 = vld [vmem:[#allocation10 + $0xe] sm:$0x1]
    %v341 = vld [vmem:[#allocation10 + $0xf] sm:$0x1]
    %v342 = vpack.c.bf16 %v159, %v158
    %v343 = vpack.c.bf16 %v330, %v329
    %v344 = vpack.c.bf16 %v332, %v331
    %v345 = vperm.slane %v338, 0
    %v347 = vsel %vm167, %v342, 0
    %349 = vmatpush.bf16.msra.mxu0 0
    %350 = vmatpush.bf16.msra.mxu0 0
    %351 = vmatpush.bf16.msra.mxu0 0
    %352 = vmatpush.bf16.msra.mxu0 0
    %353 = vmatpush.bf16.msra.mxu0 0
    %354 = vmatpush.bf16.msra.mxu0 0
    %355 = vmatpush.bf16.msra.mxu0 %v344
    %356 = vmatpush.bf16.msra.mxu0 %v343
    %357 = vmatmul.bf16.gmra.mxu0 %v347
    %v358 = vpop.f32.mrf.mxu0
    %v359 = vadd.f32 %v345, %v358
    %v360 = vpop.f32.mrf.mxu0
    %v361 = vadd.f32 %v345, %v360
    %362 = vdwg.mxu0
    %v363 = vmul.f32 %v359, 0.35355338
    %v364 = vmul.f32 %v361, 0.35355338
    %v365 = vld [vmem:[#allocation8] sm:$0xff]
    %v366 = vld [vmem:[#allocation8 + $0x8] sm:$0xff]
    %v367 = vld [vmem:[#allocation8 + $0x10] sm:$0xff]
    %v368 = vld [vmem:[#allocation8 + $0x18] sm:$0xff]
    %v369 = vpack.c.bf16 %v366, %v365
    %v370 = vpack.c.bf16 %v368, %v367
    %371 = vmatpush.bf16.msra.mxu0 0
    %372 = vmatpush.bf16.msra.mxu0 0
    %373 = vmatpush.bf16.msra.mxu0 0
    %374 = vmatpush.bf16.msra.mxu0 0
    %375 = vmatpush.bf16.msra.mxu0 0
    %376 = vmatpush.bf16.msra.mxu0 0
    %377 = vmatpush.bf16.msra.mxu0 %v370
    %378 = vmatpush.bf16.msra.mxu0 %v369
    %379 = vmatmul.bf16.gmra.mxu0 %v347
    %v380 = vpop.f32.mrf.mxu0
    %v381 = vadd.f32 0.0, %v380
    %v382 = vpop.f32.mrf.mxu0
    %v383 = vadd.f32 0.0, %v382
    %384 = vdwg.mxu0
    %v385 = vperm.slane %v339, 0
    %v386 = vadd.f32 %v381, %v385
    %v387 = vadd.f32 %v383, %v385
    %v388 = vperm.slane %v340, 0
    %390 = vrot.lane.b32.xlu0 %v388, 32
    %v391 = vpop.permute.xlu0 %390
    %v393 = vadd.f32 %v381, %v391
    %v394 = vadd.f32 %v383, %v391
    %v395 = vpack.c.bf16 %v363, %v363
    %v396 = vpack.c.bf16 %v364, %v364
    %397 = vxpose.xlu0.b32.start [1/16] %v386, 128
    %398 = vxpose.xlu0.b32.cont [2/16] %v387, 128
    %399 = vxpose.xlu0.b32.cont [3/16] 0.0, 128
    %400 = vxpose.xlu0.b32.cont [4/16] 0.0, 128
    %401 = vxpose.xlu0.b32.cont [5/16] 0.0, 128
    %402 = vxpose.xlu0.b32.cont [6/16] 0.0, 128
    %403 = vxpose.xlu0.b32.cont [7/16] 0.0, 128
    %404 = vxpose.xlu0.b32.cont [8/16] 0.0, 128
    %405 = vxpose.xlu0.b32.cont [9/16] 0.0, 128
    %406 = vxpose.xlu0.b32.cont [10/16] 0.0, 128
    %407 = vxpose.xlu0.b32.cont [11/16] 0.0, 128
    %408 = vxpose.xlu0.b32.cont [12/16] 0.0, 128
    %409 = vxpose.xlu0.b32.cont [13/16] 0.0, 128
    %410 = vxpose.xlu0.b32.cont [14/16] 0.0, 128
    %411 = vxpose.xlu0.b32.cont [15/16] 0.0, 128
    %412 = vxpose.xlu0.b32.end [16/16] 0.0, 128
    %v413 = vpop.trf.xlu0
    %v414 = vpop.trf.xlu0
    %v415 = vpop.trf.xlu0
    %v416 = vpop.trf.xlu0
    %v417 = vpop.trf.xlu0
    %v418 = vpop.trf.xlu0
    %v419 = vpop.trf.xlu0
    %v420 = vpop.trf.xlu0
    %v421 = vpop.trf.xlu0
    %v422 = vpop.trf.xlu0
    %v423 = vpop.trf.xlu0
    %v424 = vpop.trf.xlu0
    %v425 = vpop.trf.xlu0
    %v426 = vpop.trf.xlu0
    %v427 = vpop.trf.xlu0
    %v428 = vpop.trf.xlu0
    %v429 = vpack.c.bf16 %v414, %v413
    %v430 = vpack.c.bf16 %v416, %v415
    %v431 = vpack.c.bf16 %v393, %v393
    %v432 = vpack.c.bf16 %v394, %v394
    %v433 = vunpack.c.l.bf16 %v395
    %v434 = vunpack.c.l.bf16 %v396
    %v435 = vunpack.c.l.bf16 %v110
    %v436 = vmul.f32 %v433, %v435
    %v437 = vmul.f32 %v434, %v435
    %v438 = vpack.c.bf16 %v437, %v436
    %v440 = vsel %vm167, %v438, 0
    %442 = vmatpush.bf16.msra.mxu0 0
    %443 = vmatpush.bf16.msra.mxu0 0
    %444 = vmatpush.bf16.msra.mxu0 0
    %445 = vmatpush.bf16.msra.mxu0 0
    %446 = vmatpush.bf16.msra.mxu0 0
    %447 = vmatpush.bf16.msra.mxu0 0
    %448 = vmatpush.bf16.msra.mxu0 %v430
    %449 = vmatpush.bf16.msra.mxu0 %v429
    %450 = vmatmul.bf16.gmra.mxu0 %v440
    %v451 = vpop.f32.mrf.mxu0
    %v452 = vadd.f32 %v154, %v451
    %v453 = vpop.f32.mrf.mxu0
    %v454 = vadd.f32 %v155, %v453
    %455 = vdwg.mxu0
    %vm456 = vcmask 130048
    %v457 = vsel %vm456, %v452, -inf
    %458 = vmax.xlane.f32.xlu0 %v457
    %v459 = vpop.xlane.xlu0 %458
    %v460 = vsel %vm456, %v454, -inf
    %461 = vmax.xlane.f32.xlu0 %v460
    %v462 = vpop.xlane.xlu0 %461
    %v463 = vsub.f32 %v452, %v459
    %v464 = vsub.f32 %v454, %v462
    %v465 = vmul.f32 %v463, 1.442695
    %v466 = vpow.pop %v465
    %v467 = vmul.f32 %v464, 1.442695
    %v468 = vpow.pop %v467
    %v469 = vsel %vm456, %v466, 0.0
    %470 = vadd.xlane.f32.xlu0 %v469
    %v471 = vpop.xlane.xlu0 %470
    %v472 = vsel %vm456, %v468, 0.0
    %473 = vadd.xlane.f32.xlu0 %v472
    %v474 = vpop.xlane.xlu0 %473
    %v475 = vrcp.pop %v471
    %v476 = vrcp.pop %v474
    %v477 = vmul.f32 %v466, %v475
    %v478 = vmul.f32 %v468, %v476
    %v479 = vpack.c.bf16 %v478, %v477
    %v480 = vunpack.c.l.bf16 %v431
    %v481 = vunpack.c.l.bf16 %v432
    %483 = vrot.lane.b32.xlu0 %v435, 32
    %v484 = vpop.permute.xlu0 %483
    %v486 = vmul.f32 %v480, %v484
    %v487 = vmul.f32 %v481, %v484
    %v488 = vpack.c.bf16 %v487, %v486
    %v489 = vunpack.c.l.bf16 %v116
    %v490 = vmul.f32 %v433, %v489
    %v491 = vmul.f32 %v434, %v489
    %v492 = vpack.c.bf16 %v491, %v490
    %v494 = vsel %vm167, %v492, 0
    %496 = vmatpush.bf16.msra.mxu0 0
    %497 = vmatpush.bf16.msra.mxu0 0
    %498 = vmatpush.bf16.msra.mxu0 0
    %499 = vmatpush.bf16.msra.mxu0 0
    %500 = vmatpush.bf16.msra.mxu0 0
    %501 = vmatpush.bf16.msra.mxu0 0
    %502 = vmatpush.bf16.msra.mxu0 %v430
    %503 = vmatpush.bf16.msra.mxu0 %v429
    %504 = vmatmul.bf16.gmra.mxu0 %v494
    %v505 = vpop.f32.mrf.mxu0
    %v506 = vadd.f32 %v154, %v505
    %v507 = vpop.f32.mrf.mxu0
    %v508 = vadd.f32 %v155, %v507
    %509 = vdwg.mxu0
    %v510 = vsel %vm456, %v506, -inf
    %511 = vmax.xlane.f32.xlu0 %v510
    %v512 = vpop.xlane.xlu0 %511
    %v513 = vsel %vm456, %v508, -inf
    %514 = vmax.xlane.f32.xlu0 %v513
    %v515 = vpop.xlane.xlu0 %514
    %v516 = vsub.f32 %v506, %v512
    %v517 = vsub.f32 %v508, %v515
    %v518 = vmul.f32 %v516, 1.442695
    %v519 = vpow.pop %v518
    %v520 = vmul.f32 %v517, 1.442695
    %v521 = vpow.pop %v520
    %v522 = vsel %vm456, %v519, 0.0
    %523 = vadd.xlane.f32.xlu0 %v522
    %v524 = vpop.xlane.xlu0 %523
    %v525 = vsel %vm456, %v521, 0.0
    %526 = vadd.xlane.f32.xlu0 %v525
    %v527 = vpop.xlane.xlu0 %526
    %v528 = vrcp.pop %v524
    %v529 = vrcp.pop %v527
    %v530 = vmul.f32 %v519, %v528
    %v531 = vmul.f32 %v521, %v529
    %v532 = vpack.c.bf16 %v531, %v530
    %534 = vrot.lane.b32.xlu0 %v489, 32
    %v535 = vpop.permute.xlu0 %534
    %v537 = vmul.f32 %v480, %v535
    %v538 = vmul.f32 %v481, %v535
    %v539 = vpack.c.bf16 %v538, %v537
    %541 = vrot.lane.b32.xlu0 %v539, 96
    %v542 = vpop.permute.xlu0 %541
    %v545 = vsel %vm456, %v532, 0
    %547 = vmatpush.bf16.msra.mxu0 0
    %548 = vmatpush.bf16.msra.mxu0 0
    %549 = vmatpush.bf16.msra.mxu0 0
    %550 = vmatpush.bf16.msra.mxu0 0
    %551 = vmatpush.bf16.msra.mxu0 0
    %552 = vmatpush.bf16.msra.mxu0 0
    %553 = vmatpush.bf16.msra.mxu0 0
    %554 = vmatpush.bf16.msra.mxu0 %v542
    %555 = vmatmul.bf16.gmra.mxu0 %v545
    %v556 = vpop.f32.mrf.mxu0
    %v557 = vadd.f32 0.0, %v556
    %v558 = vpop.f32.mrf.mxu0
    %v559 = vadd.f32 0.0, %v558
    %560 = vdwg.mxu0
    %562 = vrot.lane.b32.xlu0 %v488, 96
    %v563 = vpop.permute.xlu0 %562
    %v566 = vsel %vm456, %v479, 0
    %568 = vmatpush.bf16.msra.mxu0 0
    %569 = vmatpush.bf16.msra.mxu0 0
    %570 = vmatpush.bf16.msra.mxu0 0
    %571 = vmatpush.bf16.msra.mxu0 0
    %572 = vmatpush.bf16.msra.mxu0 0
    %573 = vmatpush.bf16.msra.mxu0 0
    %574 = vmatpush.bf16.msra.mxu0 0
    %575 = vmatpush.bf16.msra.mxu0 %v563
    %576 = vmatmul.bf16.gmra.mxu0 %v566
    %v577 = vpop.f32.mrf.mxu0
    %v578 = vadd.f32 %v557, %v577
    %v579 = vpop.f32.mrf.mxu0
    %v580 = vadd.f32 %v559, %v579
    %581 = vdwg.mxu0
    %v582 = vunpack.c.l.bf16 %v122
    %v583 = vmul.f32 %v433, %v582
    %v584 = vmul.f32 %v434, %v582
    %v585 = vpack.c.bf16 %v584, %v583
    %v587 = vsel %vm167, %v585, 0
    %589 = vmatpush.bf16.msra.mxu0 0
    %590 = vmatpush.bf16.msra.mxu0 0
    %591 = vmatpush.bf16.msra.mxu0 0
    %592 = vmatpush.bf16.msra.mxu0 0
    %593 = vmatpush.bf16.msra.mxu0 0
    %594 = vmatpush.bf16.msra.mxu0 0
    %595 = vmatpush.bf16.msra.mxu0 %v430
    %596 = vmatpush.bf16.msra.mxu0 %v429
    %597 = vmatmul.bf16.gmra.mxu0 %v587
    %v598 = vpop.f32.mrf.mxu0
    %v599 = vadd.f32 %v154, %v598
    %v600 = vpop.f32.mrf.mxu0
    %v601 = vadd.f32 %v155, %v600
    %602 = vdwg.mxu0
    %v603 = vsel %vm456, %v599, -inf
    %604 = vmax.xlane.f32.xlu0 %v603
    %v605 = vpop.xlane.xlu0 %604
    %v606 = vsel %vm456, %v601, -inf
    %607 = vmax.xlane.f32.xlu0 %v606
    %v608 = vpop.xlane.xlu0 %607
    %v609 = vsub.f32 %v599, %v605
    %v610 = vsub.f32 %v601, %v608
    %v611 = vmul.f32 %v609, 1.442695
    %v612 = vpow.pop %v611
    %v613 = vmul.f32 %v610, 1.442695
    %v614 = vpow.pop %v613
    %v615 = vsel %vm456, %v612, 0.0
    %616 = vadd.xlane.f32.xlu0 %v615
    %v617 = vpop.xlane.xlu0 %616
    %v618 = vsel %vm456, %v614, 0.0
    %619 = vadd.xlane.f32.xlu0 %v618
    %v620 = vpop.xlane.xlu0 %619
    %v621 = vrcp.pop %v617
    %v622 = vrcp.pop %v620
    %v623 = vmul.f32 %v612, %v621
    %v624 = vmul.f32 %v614, %v622
    %v625 = vpack.c.bf16 %v624, %v623
    %627 = vrot.lane.b32.xlu0 %v582, 32
    %v628 = vpop.permute.xlu0 %627
    %v630 = vmul.f32 %v480, %v628
    %v631 = vmul.f32 %v481, %v628
    %v632 = vpack.c.bf16 %v631, %v630
    %634 = vrot.lane.b32.xlu0 %v632, 96
    %v635 = vpop.permute.xlu0 %634
    %v638 = vsel %vm456, %v625, 0
    %640 = vmatpush.bf16.msra.mxu0 0
    %641 = vmatpush.bf16.msra.mxu0 0
    %642 = vmatpush.bf16.msra.mxu0 0
    %643 = vmatpush.bf16.msra.mxu0 0
    %644 = vmatpush.bf16.msra.mxu0 0
    %645 = vmatpush.bf16.msra.mxu0 0
    %646 = vmatpush.bf16.msra.mxu0 0
    %647 = vmatpush.bf16.msra.mxu0 %v635
    %648 = vmatmul.bf16.gmra.mxu0 %v638
    %v649 = vpop.f32.mrf.mxu0
    %v650 = vadd.f32 0.0, %v649
    %v651 = vpop.f32.mrf.mxu0
    %v652 = vadd.f32 0.0, %v651
    %653 = vdwg.mxu0
    %v654 = vadd.f32 %v578, %v650
    %v655 = vadd.f32 %v580, %v652
    %v656 = vunpack.c.l.bf16 %v128
    %v657 = vmul.f32 %v433, %v656
    %v658 = vmul.f32 %v434, %v656
    %v659 = vpack.c.bf16 %v658, %v657
    %v661 = vsel %vm167, %v659, 0
    %663 = vmatpush.bf16.msra.mxu0 0
    %664 = vmatpush.bf16.msra.mxu0 0
    %665 = vmatpush.bf16.msra.mxu0 0
    %666 = vmatpush.bf16.msra.mxu0 0
    %667 = vmatpush.bf16.msra.mxu0 0
    %668 = vmatpush.bf16.msra.mxu0 0
    %669 = vmatpush.bf16.msra.mxu0 %v430
    %670 = vmatpush.bf16.msra.mxu0 %v429
    %671 = vmatmul.bf16.gmra.mxu0 %v661
    %v672 = vpop.f32.mrf.mxu0
    %v673 = vadd.f32 %v154, %v672
    %v674 = vpop.f32.mrf.mxu0
    %v675 = vadd.f32 %v155, %v674
    %676 = vdwg.mxu0
    %v677 = vsel %vm456, %v673, -inf
    %678 = vmax.xlane.f32.xlu0 %v677
    %v679 = vpop.xlane.xlu0 %678
    %v680 = vsel %vm456, %v675, -inf
    %681 = vmax.xlane.f32.xlu0 %v680
    %v682 = vpop.xlane.xlu0 %681
    %v683 = vsub.f32 %v673, %v679
    %v684 = vsub.f32 %v675, %v682
    %v685 = vmul.f32 %v683, 1.442695
    %v686 = vpow.pop %v685
    %v687 = vmul.f32 %v684, 1.442695
    %v688 = vpow.pop %v687
    %v689 = vsel %vm456, %v686, 0.0
    %690 = vadd.xlane.f32.xlu0 %v689
    %v691 = vpop.xlane.xlu0 %690
    %v692 = vsel %vm456, %v688, 0.0
    %693 = vadd.xlane.f32.xlu0 %v692
    %v694 = vpop.xlane.xlu0 %693
    %v695 = vrcp.pop %v691
    %v696 = vrcp.pop %v694
    %v697 = vmul.f32 %v686, %v695
    %v698 = vmul.f32 %v688, %v696
    %v699 = vpack.c.bf16 %v698, %v697
    %701 = vrot.lane.b32.xlu0 %v656, 32
    %v702 = vpop.permute.xlu0 %701
    %v704 = vmul.f32 %v480, %v702
    %v705 = vmul.f32 %v481, %v702
    %v706 = vpack.c.bf16 %v705, %v704
    %708 = vrot.lane.b32.xlu0 %v706, 96
    %v709 = vpop.permute.xlu0 %708
    %v712 = vsel %vm456, %v699, 0
    %714 = vmatpush.bf16.msra.mxu0 0
    %715 = vmatpush.bf16.msra.mxu0 0
    %716 = vmatpush.bf16.msra.mxu0 0
    %717 = vmatpush.bf16.msra.mxu0 0
    %718 = vmatpush.bf16.msra.mxu0 0
    %719 = vmatpush.bf16.msra.mxu0 0
    %720 = vmatpush.bf16.msra.mxu0 0
    %721 = vmatpush.bf16.msra.mxu0 %v709
    %722 = vmatmul.bf16.gmra.mxu0 %v712
    %v723 = vpop.f32.mrf.mxu0
    %v724 = vadd.f32 0.0, %v723
    %v725 = vpop.f32.mrf.mxu0
    %v726 = vadd.f32 0.0, %v725
    %727 = vdwg.mxu0
    %v728 = vadd.f32 %v654, %v724
    %v729 = vadd.f32 %v655, %v726
    %v730 = vpack.c.bf16 %v729, %v728
    %v731 = vpack.c.bf16 %v335, %v334
    %v732 = vpack.c.bf16 %v337, %v336
    %v733 = vperm.slane %v341, 0
    %v735 = vsel %vm167, %v730, 0
    %737 = vmatpush.bf16.msra.mxu0 0
    %738 = vmatpush.bf16.msra.mxu0 0
    %739 = vmatpush.bf16.msra.mxu0 0
    %740 = vmatpush.bf16.msra.mxu0 0
    %741 = vmatpush.bf16.msra.mxu0 0
    %742 = vmatpush.bf16.msra.mxu0 0
    %743 = vmatpush.bf16.msra.mxu0 %v732
    %744 = vmatpush.bf16.msra.mxu0 %v731
    %745 = vmatmul.bf16.gmra.mxu0 %v735
    %v746 = vpop.f32.mrf.mxu0
    %v747 = vadd.f32 %v733, %v746
    %v748 = vpop.f32.mrf.mxu0
    %v749 = vadd.f32 %v733, %v748
    %750 = vdwg.mxu0
    %v751 = vadd.f32 %v747, %v158
    %v752 = vadd.f32 %v749, %v159
    %v753 = vld [vmem:[#allocation10 + $0x2] sm:$0x1]
    %v754 = vld [vmem:[#allocation10 + $0x7] sm:$0x1]
    %v755 = vsel %vm167, %v751, 0.0
    %756 = vadd.xlane.f32.xlu0 %v755
    %v757 = vpop.xlane.xlu0 %756
    %v758 = vsel %vm167, %v752, 0.0
    %759 = vadd.xlane.f32.xlu0 %v758
    %v760 = vpop.xlane.xlu0 %759
    %v761 = vmul.f32 %v757, %v283
    %v762 = vmul.f32 %v760, %v283
    %v763 = vsub.f32 %v751, %v761
    %v764 = vsub.f32 %v752, %v762
    %v765 = vmul.f32 %v763, %v763
    %v766 = vmul.f32 %v764, %v764
    %v767 = vsel %vm167, %v765, 0.0
    %768 = vadd.xlane.f32.xlu0 %v767
    %v769 = vpop.xlane.xlu0 %768
    %v770 = vsel %vm167, %v766, 0.0
    %771 = vadd.xlane.f32.xlu0 %v770
    %v772 = vpop.xlane.xlu0 %771
    %v773 = vmul.f32 %v769, %v283
    %v774 = vmul.f32 %v772, %v283
    %v775 = vadd.f32 %v773, 1e-05
    %v776 = vadd.f32 %v774, 1e-05
    %v777 = vrsqrt.pop %v775
    %v778 = vmul.f32 %v777, %v775
    %v779 = vmul.f32 %v778, %v777
    %v780 = vmul.f32 0.5, %v779
    %v781 = vsub.f32 1.5, %v780
    %v782 = vmul.f32 %v777, %v781
    %vm783 = vweird.f32 %v775
    %vm784 = vweird.f32 %v777
    %vm785 = vmor %vm783, %vm784
    %v786 = vsel %vm785, %v777, %v782
    %v787 = vrsqrt.pop %v776
    %v788 = vmul.f32 %v787, %v776
    %v789 = vmul.f32 %v788, %v787
    %v790 = vmul.f32 0.5, %v789
    %v791 = vsub.f32 1.5, %v790
    %v792 = vmul.f32 %v787, %v791
    %vm793 = vweird.f32 %v776
    %vm794 = vweird.f32 %v787
    %vm795 = vmor %vm793, %vm794
    %v796 = vsel %vm795, %v787, %v792
    %v797 = vmul.f32 %v763, %v786
    %v798 = vmul.f32 %v764, %v796
    %v799 = vperm.slane %v753, 0
    %v800 = vmul.f32 %v797, %v799
    %v801 = vmul.f32 %v798, %v799
    %v802 = vperm.slane %v754, 0
    %v803 = vadd.f32 %v800, %v802
    %v804 = vadd.f32 %v801, %v802
    %s805 = scalar_lea.vmem [#allocation7], 288
    %v806 = vld [vmem:[%s805] sm:$0xff]
    %v807 = vld [vmem:[%s805 + $0x8] sm:$0xff]
    %v808 = vld [vmem:[%s805 + $0x10] sm:$0xff]
    %v809 = vld [vmem:[%s805 + $0x18] sm:$0xff]
    %v810 = vpack.c.bf16 %v804, %v803
    %v811 = vpack.c.bf16 %v807, %v806
    %v812 = vpack.c.bf16 %v809, %v808
    %v813 = vld [vmem:[#allocation10 + $0xb] sm:$0x1]
    %v814 = vperm.slane %v813, 0
    %v816 = vsel %vm167, %v810, 0
    %818 = vmatpush.bf16.msra.mxu0 0
    %819 = vmatpush.bf16.msra.mxu0 0
    %820 = vmatpush.bf16.msra.mxu0 0
    %821 = vmatpush.bf16.msra.mxu0 0
    %822 = vmatpush.bf16.msra.mxu0 0
    %823 = vmatpush.bf16.msra.mxu0 0
    %824 = vmatpush.bf16.msra.mxu0 %v812
    %825 = vmatpush.bf16.msra.mxu0 %v811
    %826 = vmatmul.bf16.gmra.mxu0 %v816
    %v827 = vpop.f32.mrf.mxu0
    %v828 = vadd.f32 %v814, %v827
    %v829 = vpop.f32.mrf.mxu0
    %v830 = vadd.f32 %v814, %v829
    %831 = vdwg.mxu0
    %v832 = vmax.f32 %v828, 0.0
    %v833 = vmax.f32 %v830, 0.0
    %v834 = vld [vmem:[#allocation10 + $0x3] sm:$0x1]
    %v835 = vld [vmem:[#allocation10 + $0x8] sm:$0x1]
    %v836 = vsel %vm167, %v832, 0.0
    %837 = vadd.xlane.f32.xlu0 %v836
    %v838 = vpop.xlane.xlu0 %837
    %v839 = vsel %vm167, %v833, 0.0
    %840 = vadd.xlane.f32.xlu0 %v839
    %v841 = vpop.xlane.xlu0 %840
    %v842 = vmul.f32 %v838, %v283
    %v843 = vmul.f32 %v841, %v283
    %v844 = vsub.f32 %v832, %v842
    %v845 = vsub.f32 %v833, %v843
    %v846 = vmul.f32 %v844, %v844
    %v847 = vmul.f32 %v845, %v845
    %v848 = vsel %vm167, %v846, 0.0
    %849 = vadd.xlane.f32.xlu0 %v848
    %v850 = vpop.xlane.xlu0 %849
    %v851 = vsel %vm167, %v847, 0.0
    %852 = vadd.xlane.f32.xlu0 %v851
    %v853 = vpop.xlane.xlu0 %852
    %v854 = vmul.f32 %v850, %v283
    %v855 = vmul.f32 %v853, %v283
    %v856 = vadd.f32 %v854, 1e-05
    %v857 = vadd.f32 %v855, 1e-05
    %v858 = vrsqrt.pop %v856
    %v859 = vmul.f32 %v858, %v856
    %v860 = vmul.f32 %v859, %v858
    %v861 = vmul.f32 0.5, %v860
    %v862 = vsub.f32 1.5, %v861
    %v863 = vmul.f32 %v858, %v862
    %vm864 = vweird.f32 %v856
    %vm865 = vweird.f32 %v858
    %vm866 = vmor %vm864, %vm865
    %v867 = vsel %vm866, %v858, %v863
    %v868 = vrsqrt.pop %v857
    %v869 = vmul.f32 %v868, %v857
    %v870 = vmul.f32 %v869, %v868
    %v871 = vmul.f32 0.5, %v870
    %v872 = vsub.f32 1.5, %v871
    %v873 = vmul.f32 %v868, %v872
    %vm874 = vweird.f32 %v857
    %vm875 = vweird.f32 %v868
    %vm876 = vmor %vm874, %vm875
    %v877 = vsel %vm876, %v868, %v873
    %v878 = vmul.f32 %v844, %v867
    %v879 = vmul.f32 %v845, %v877
    %v880 = vperm.slane %v834, 0
    %v881 = vmul.f32 %v878, %v880
    %v882 = vmul.f32 %v879, %v880
    %v883 = vperm.slane %v835, 0
    %v884 = vadd.f32 %v881, %v883
    %v885 = vadd.f32 %v882, %v883
    %v886 = vadd.f32 %v884, %v803
    %v887 = vadd.f32 %v885, %v804
    %s888 = scalar_lea.vmem [#allocation7], 160
    %v889 = vld [vmem:[%s888] sm:$0xff]
    %v890 = vld [vmem:[%s888 + $0x8] sm:$0xff]
    %v891 = vld [vmem:[%s888 + $0x10] sm:$0xff]
    %v892 = vld [vmem:[%s888 + $0x18] sm:$0xff]
    %s893 = scalar_lea.vmem [#allocation7], 192
    %v894 = vld [vmem:[%s893] sm:$0xff]
    %v895 = vld [vmem:[%s893 + $0x8] sm:$0xff]
    %v896 = vld [vmem:[%s893 + $0x10] sm:$0xff]
    %v897 = vld [vmem:[%s893 + $0x18] sm:$0xff]
    %v898 = vld [vmem:[#allocation10 + $0x10] sm:$0x1]
    %v899 = vld [vmem:[#allocation10 + $0x11] sm:$0x1]
    %v900 = vld [vmem:[#allocation10 + $0x12] sm:$0x1]
    %v901 = vld [vmem:[#allocation10 + $0x13] sm:$0x1]
    %v902 = vpack.c.bf16 %v887, %v886
    %v903 = vpack.c.bf16 %v890, %v889
    %v904 = vpack.c.bf16 %v892, %v891
    %v905 = vperm.slane %v898, 0
    %v907 = vsel %vm167, %v902, 0
    %909 = vmatpush.bf16.msra.mxu0 0
    %910 = vmatpush.bf16.msra.mxu0 0
    %911 = vmatpush.bf16.msra.mxu0 0
    %912 = vmatpush.bf16.msra.mxu0 0
    %913 = vmatpush.bf16.msra.mxu0 0
    %914 = vmatpush.bf16.msra.mxu0 0
    %915 = vmatpush.bf16.msra.mxu0 %v904
    %916 = vmatpush.bf16.msra.mxu0 %v903
    %917 = vmatmul.bf16.gmra.mxu0 %v907
    %v918 = vpop.f32.mrf.mxu0
    %v919 = vadd.f32 %v905, %v918
    %v920 = vpop.f32.mrf.mxu0
    %v921 = vadd.f32 %v905, %v920
    %922 = vdwg.mxu0
    %v923 = vmul.f32 %v919, 0.35355338
    %v924 = vmul.f32 %v921, 0.35355338
    %s925 = scalar_lea.vmem [#allocation8], 32
    %v926 = vld [vmem:[%s925] sm:$0xff]
    %v927 = vld [vmem:[%s925 + $0x8] sm:$0xff]
    %v928 = vld [vmem:[%s925 + $0x10] sm:$0xff]
    %v929 = vld [vmem:[%s925 + $0x18] sm:$0xff]
    %v930 = vpack.c.bf16 %v327, %v326
    %v931 = vpack.c.bf16 %v927, %v926
    %v932 = vpack.c.bf16 %v929, %v928
    %v934 = vsel %vm167, %v930, 0
    %936 = vmatpush.bf16.msra.mxu0 0
    %937 = vmatpush.bf16.msra.mxu0 0
    %938 = vmatpush.bf16.msra.mxu0 0
    %939 = vmatpush.bf16.msra.mxu0 0
    %940 = vmatpush.bf16.msra.mxu0 0
    %941 = vmatpush.bf16.msra.mxu0 0
    %942 = vmatpush.bf16.msra.mxu0 %v932
    %943 = vmatpush.bf16.msra.mxu0 %v931
    %944 = vmatmul.bf16.gmra.mxu0 %v934
    %v945 = vpop.f32.mrf.mxu0
    %v946 = vadd.f32 0.0, %v945
    %v947 = vpop.f32.mrf.mxu0
    %v948 = vadd.f32 0.0, %v947
    %949 = vdwg.mxu0
    %v950 = vperm.slane %v899, 0
    %v951 = vadd.f32 %v946, %v950
    %v952 = vadd.f32 %v948, %v950
    %v953 = vperm.slane %v900, 0
    %955 = vrot.lane.b32.xlu0 %v953, 32
    %v956 = vpop.permute.xlu0 %955
    %v958 = vadd.f32 %v946, %v956
    %v959 = vadd.f32 %v948, %v956
    %v960 = vpack.c.bf16 %v923, %v923
    %v961 = vpack.c.bf16 %v924, %v924
    %962 = vxpose.xlu0.b32.start [1/16] %v951, 128
    %963 = vxpose.xlu0.b32.cont [2/16] %v952, 128
    %964 = vxpose.xlu0.b32.cont [3/16] 0.0, 128
    %965 = vxpose.xlu0.b32.cont [4/16] 0.0, 128
    %966 = vxpose.xlu0.b32.cont [5/16] 0.0, 128
    %967 = vxpose.xlu0.b32.cont [6/16] 0.0, 128
    %968 = vxpose.xlu0.b32.cont [7/16] 0.0, 128
    %969 = vxpose.xlu0.b32.cont [8/16] 0.0, 128
    %970 = vxpose.xlu0.b32.cont [9/16] 0.0, 128
    %971 = vxpose.xlu0.b32.cont [10/16] 0.0, 128
    %972 = vxpose.xlu0.b32.cont [11/16] 0.0, 128
    %973 = vxpose.xlu0.b32.cont [12/16] 0.0, 128
    %974 = vxpose.xlu0.b32.cont [13/16] 0.0, 128
    %975 = vxpose.xlu0.b32.cont [14/16] 0.0, 128
    %976 = vxpose.xlu0.b32.cont [15/16] 0.0, 128
    %977 = vxpose.xlu0.b32.end [16/16] 0.0, 128
    %v978 = vpop.trf.xlu0
    %v979 = vpop.trf.xlu0
    %v980 = vpop.trf.xlu0
    %v981 = vpop.trf.xlu0
    %v982 = vpop.trf.xlu0
    %v983 = vpop.trf.xlu0
    %v984 = vpop.trf.xlu0
    %v985 = vpop.trf.xlu0
    %v986 = vpop.trf.xlu0
    %v987 = vpop.trf.xlu0
    %v988 = vpop.trf.xlu0
    %v989 = vpop.trf.xlu0
    %v990 = vpop.trf.xlu0
    %v991 = vpop.trf.xlu0
    %v992 = vpop.trf.xlu0
    %v993 = vpop.trf.xlu0
    %v994 = vpack.c.bf16 %v979, %v978
    %v995 = vpack.c.bf16 %v981, %v980
    %v996 = vpack.c.bf16 %v958, %v958
    %v997 = vpack.c.bf16 %v959, %v959
    %v998 = vunpack.c.l.bf16 %v960
    %v999 = vunpack.c.l.bf16 %v961
    %v1000 = vmul.f32 %v998, %v435
    %v1001 = vmul.f32 %v999, %v435
    %v1002 = vpack.c.bf16 %v1001, %v1000
    %v1004 = vsel %vm167, %v1002, 0
    %1006 = vmatpush.bf16.msra.mxu0 0
    %1007 = vmatpush.bf16.msra.mxu0 0
    %1008 = vmatpush.bf16.msra.mxu0 0
    %1009 = vmatpush.bf16.msra.mxu0 0
    %1010 = vmatpush.bf16.msra.mxu0 0
    %1011 = vmatpush.bf16.msra.mxu0 0
    %1012 = vmatpush.bf16.msra.mxu0 %v995
    %1013 = vmatpush.bf16.msra.mxu0 %v994
    %1014 = vmatmul.bf16.gmra.mxu0 %v1004
    %v1015 = vpop.f32.mrf.mxu0
    %v1016 = vadd.f32 %v154, %v1015
    %v1017 = vpop.f32.mrf.mxu0
    %v1018 = vadd.f32 %v155, %v1017
    %1019 = vdwg.mxu0
    %v1020 = vsel %vm456, %v1016, -inf
    %1021 = vmax.xlane.f32.xlu0 %v1020
    %v1022 = vpop.xlane.xlu0 %1021
    %v1023 = vsel %vm456, %v1018, -inf
    %1024 = vmax.xlane.f32.xlu0 %v1023
    %v1025 = vpop.xlane.xlu0 %1024
    %v1026 = vsub.f32 %v1016, %v1022
    %v1027 = vsub.f32 %v1018, %v1025
    %v1028 = vmul.f32 %v1026, 1.442695
    %v1029 = vpow.pop %v1028
    %v1030 = vmul.f32 %v1027, 1.442695
    %v1031 = vpow.pop %v1030
    %v1032 = vsel %vm456, %v1029, 0.0
    %1033 = vadd.xlane.f32.xlu0 %v1032
    %v1034 = vpop.xlane.xlu0 %1033
    %v1035 = vsel %vm456, %v1031, 0.0
    %1036 = vadd.xlane.f32.xlu0 %v1035
    %v1037 = vpop.xlane.xlu0 %1036
    %v1038 = vrcp.pop %v1034
    %v1039 = vrcp.pop %v1037
    %v1040 = vmul.f32 %v1029, %v1038
    %v1041 = vmul.f32 %v1031, %v1039
    %v1042 = vpack.c.bf16 %v1041, %v1040
    %v1043 = vunpack.c.l.bf16 %v996
    %v1044 = vunpack.c.l.bf16 %v997
    %v1045 = vmul.f32 %v1043, %v484
    %v1046 = vmul.f32 %v1044, %v484
    %v1047 = vpack.c.bf16 %v1046, %v1045
    %v1048 = vmul.f32 %v998, %v489
    %v1049 = vmul.f32 %v999, %v489
    %v1050 = vpack.c.bf16 %v1049, %v1048
    %v1052 = vsel %vm167, %v1050, 0
    %1054 = vmatpush.bf16.msra.mxu0 0
    %1055 = vmatpush.bf16.msra.mxu0 0
    %1056 = vmatpush.bf16.msra.mxu0 0
    %1057 = vmatpush.bf16.msra.mxu0 0
    %1058 = vmatpush.bf16.msra.mxu0 0
    %1059 = vmatpush.bf16.msra.mxu0 0
    %1060 = vmatpush.bf16.msra.mxu0 %v995
    %1061 = vmatpush.bf16.msra.mxu0 %v994
    %1062 = vmatmul.bf16.gmra.mxu0 %v1052
    %v1063 = vpop.f32.mrf.mxu0
    %v1064 = vadd.f32 %v154, %v1063
    %v1065 = vpop.f32.mrf.mxu0
    %v1066 = vadd.f32 %v155, %v1065
    %1067 = vdwg.mxu0
    %v1068 = vsel %vm456, %v1064, -inf
    %1069 = vmax.xlane.f32.xlu0 %v1068
    %v1070 = vpop.xlane.xlu0 %1069
    %v1071 = vsel %vm456, %v1066, -inf
    %1072 = vmax.xlane.f32.xlu0 %v1071
    %v1073 = vpop.xlane.xlu0 %1072
    %v1074 = vsub.f32 %v1064, %v1070
    %v1075 = vsub.f32 %v1066, %v1073
    %v1076 = vmul.f32 %v1074, 1.442695
    %v1077 = vpow.pop %v1076
    %v1078 = vmul.f32 %v1075, 1.442695
    %v1079 = vpow.pop %v1078
    %v1080 = vsel %vm456, %v1077, 0.0
    %1081 = vadd.xlane.f32.xlu0 %v1080
    %v1082 = vpop.xlane.xlu0 %1081
    %v1083 = vsel %vm456, %v1079, 0.0
    %1084 = vadd.xlane.f32.xlu0 %v1083
    %v1085 = vpop.xlane.xlu0 %1084
    %v1086 = vrcp.pop %v1082
    %v1087 = vrcp.pop %v1085
    %v1088 = vmul.f32 %v1077, %v1086
    %v1089 = vmul.f32 %v1079, %v1087
    %v1090 = vpack.c.bf16 %v1089, %v1088
    %v1091 = vmul.f32 %v1043, %v535
    %v1092 = vmul.f32 %v1044, %v535
    %v1093 = vpack.c.bf16 %v1092, %v1091
    %1095 = vrot.lane.b32.xlu0 %v1093, 96
    %v1096 = vpop.permute.xlu0 %1095
    %v1099 = vsel %vm456, %v1090, 0
    %1101 = vmatpush.bf16.msra.mxu0 0
    %1102 = vmatpush.bf16.msra.mxu0 0
    %1103 = vmatpush.bf16.msra.mxu0 0
    %1104 = vmatpush.bf16.msra.mxu0 0
    %1105 = vmatpush.bf16.msra.mxu0 0
    %1106 = vmatpush.bf16.msra.mxu0 0
    %1107 = vmatpush.bf16.msra.mxu0 0
    %1108 = vmatpush.bf16.msra.mxu0 %v1096
    %1109 = vmatmul.bf16.gmra.mxu0 %v1099
    %v1110 = vpop.f32.mrf.mxu0
    %v1111 = vadd.f32 0.0, %v1110
    %v1112 = vpop.f32.mrf.mxu0
    %v1113 = vadd.f32 0.0, %v1112
    %1114 = vdwg.mxu0
    %1116 = vrot.lane.b32.xlu0 %v1047, 96
    %v1117 = vpop.permute.xlu0 %1116
    %v1120 = vsel %vm456, %v1042, 0
    %1122 = vmatpush.bf16.msra.mxu0 0
    %1123 = vmatpush.bf16.msra.mxu0 0
    %1124 = vmatpush.bf16.msra.mxu0 0
    %1125 = vmatpush.bf16.msra.mxu0 0
    %1126 = vmatpush.bf16.msra.mxu0 0
    %1127 = vmatpush.bf16.msra.mxu0 0
    %1128 = vmatpush.bf16.msra.mxu0 0
    %1129 = vmatpush.bf16.msra.mxu0 %v1117
    %1130 = vmatmul.bf16.gmra.mxu0 %v1120
    %v1131 = vpop.f32.mrf.mxu0
    %v1132 = vadd.f32 %v1111, %v1131
    %v1133 = vpop.f32.mrf.mxu0
    %v1134 = vadd.f32 %v1113, %v1133
    %1135 = vdwg.mxu0
    %v1136 = vmul.f32 %v998, %v582
    %v1137 = vmul.f32 %v999, %v582
    %v1138 = vpack.c.bf16 %v1137, %v1136
    %v1140 = vsel %vm167, %v1138, 0
    %1142 = vmatpush.bf16.msra.mxu0 0
    %1143 = vmatpush.bf16.msra.mxu0 0
    %1144 = vmatpush.bf16.msra.mxu0 0
    %1145 = vmatpush.bf16.msra.mxu0 0
    %1146 = vmatpush.bf16.msra.mxu0 0
    %1147 = vmatpush.bf16.msra.mxu0 0
    %1148 = vmatpush.bf16.msra.mxu0 %v995
    %1149 = vmatpush.bf16.msra.mxu0 %v994
    %1150 = vmatmul.bf16.gmra.mxu0 %v1140
    %v1151 = vpop.f32.mrf.mxu0
    %v1152 = vadd.f32 %v154, %v1151
    %v1153 = vpop.f32.mrf.mxu0
    %v1154 = vadd.f32 %v155, %v1153
    %1155 = vdwg.mxu0
    %v1156 = vsel %vm456, %v1152, -inf
    %1157 = vmax.xlane.f32.xlu0 %v1156
    %v1158 = vpop.xlane.xlu0 %1157
    %v1159 = vsel %vm456, %v1154, -inf
    %1160 = vmax.xlane.f32.xlu0 %v1159
    %v1161 = vpop.xlane.xlu0 %1160
    %v1162 = vsub.f32 %v1152, %v1158
    %v1163 = vsub.f32 %v1154, %v1161
    %v1164 = vmul.f32 %v1162, 1.442695
    %v1165 = vpow.pop %v1164
    %v1166 = vmul.f32 %v1163, 1.442695
    %v1167 = vpow.pop %v1166
    %v1168 = vsel %vm456, %v1165, 0.0
    %1169 = vadd.xlane.f32.xlu0 %v1168
    %v1170 = vpop.xlane.xlu0 %1169
    %v1171 = vsel %vm456, %v1167, 0.0
    %1172 = vadd.xlane.f32.xlu0 %v1171
    %v1173 = vpop.xlane.xlu0 %1172
    %v1174 = vrcp.pop %v1170
    %v1175 = vrcp.pop %v1173
    %v1176 = vmul.f32 %v1165, %v1174
    %v1177 = vmul.f32 %v1167, %v1175
    %v1178 = vpack.c.bf16 %v1177, %v1176
    %v1179 = vmul.f32 %v1043, %v628
    %v1180 = vmul.f32 %v1044, %v628
    %v1181 = vpack.c.bf16 %v1180, %v1179
    %1183 = vrot.lane.b32.xlu0 %v1181, 96
    %v1184 = vpop.permute.xlu0 %1183
    %v1187 = vsel %vm456, %v1178, 0
    %1189 = vmatpush.bf16.msra.mxu0 0
    %1190 = vmatpush.bf16.msra.mxu0 0
    %1191 = vmatpush.bf16.msra.mxu0 0
    %1192 = vmatpush.bf16.msra.mxu0 0
    %1193 = vmatpush.bf16.msra.mxu0 0
    %1194 = vmatpush.bf16.msra.mxu0 0
    %1195 = vmatpush.bf16.msra.mxu0 0
    %1196 = vmatpush.bf16.msra.mxu0 %v1184
    %1197 = vmatmul.bf16.gmra.mxu0 %v1187
    %v1198 = vpop.f32.mrf.mxu0
    %v1199 = vadd.f32 0.0, %v1198
    %v1200 = vpop.f32.mrf.mxu0
    %v1201 = vadd.f32 0.0, %v1200
    %1202 = vdwg.mxu0
    %v1203 = vadd.f32 %v1132, %v1199
    %v1204 = vadd.f32 %v1134, %v1201
    %v1205 = vmul.f32 %v998, %v656
    %v1206 = vmul.f32 %v999, %v656
    %v1207 = vpack.c.bf16 %v1206, %v1205
    %v1209 = vsel %vm167, %v1207, 0
    %1211 = vmatpush.bf16.msra.mxu0 0
    %1212 = vmatpush.bf16.msra.mxu0 0
    %1213 = vmatpush.bf16.msra.mxu0 0
    %1214 = vmatpush.bf16.msra.mxu0 0
    %1215 = vmatpush.bf16.msra.mxu0 0
    %1216 = vmatpush.bf16.msra.mxu0 0
    %1217 = vmatpush.bf16.msra.mxu0 %v995
    %1218 = vmatpush.bf16.msra.mxu0 %v994
    %1219 = vmatmul.bf16.gmra.mxu0 %v1209
    %v1220 = vpop.f32.mrf.mxu0
    %v1221 = vadd.f32 %v154, %v1220
    %v1222 = vpop.f32.mrf.mxu0
    %v1223 = vadd.f32 %v155, %v1222
    %1224 = vdwg.mxu0
    %v1225 = vsel %vm456, %v1221, -inf
    %1226 = vmax.xlane.f32.xlu0 %v1225
    %v1227 = vpop.xlane.xlu0 %1226
    %v1228 = vsel %vm456, %v1223, -inf
    %1229 = vmax.xlane.f32.xlu0 %v1228
    %v1230 = vpop.xlane.xlu0 %1229
    %v1231 = vsub.f32 %v1221, %v1227
    %v1232 = vsub.f32 %v1223, %v1230
    %v1233 = vmul.f32 %v1231, 1.442695
    %v1234 = vpow.pop %v1233
    %v1235 = vmul.f32 %v1232, 1.442695
    %v1236 = vpow.pop %v1235
    %v1237 = vsel %vm456, %v1234, 0.0
    %1238 = vadd.xlane.f32.xlu0 %v1237
    %v1239 = vpop.xlane.xlu0 %1238
    %v1240 = vsel %vm456, %v1236, 0.0
    %1241 = vadd.xlane.f32.xlu0 %v1240
    %v1242 = vpop.xlane.xlu0 %1241
    %v1243 = vrcp.pop %v1239
    %v1244 = vrcp.pop %v1242
    %v1245 = vmul.f32 %v1234, %v1243
    %v1246 = vmul.f32 %v1236, %v1244
    %v1247 = vpack.c.bf16 %v1246, %v1245
    %v1248 = vmul.f32 %v1043, %v702
    %v1249 = vmul.f32 %v1044, %v702
    %v1250 = vpack.c.bf16 %v1249, %v1248
    %1252 = vrot.lane.b32.xlu0 %v1250, 96
    %v1253 = vpop.permute.xlu0 %1252
    %v1256 = vsel %vm456, %v1247, 0
    %1258 = vmatpush.bf16.msra.mxu0 0
    %1259 = vmatpush.bf16.msra.mxu0 0
    %1260 = vmatpush.bf16.msra.mxu0 0
    %1261 = vmatpush.bf16.msra.mxu0 0
    %1262 = vmatpush.bf16.msra.mxu0 0
    %1263 = vmatpush.bf16.msra.mxu0 0
    %1264 = vmatpush.bf16.msra.mxu0 0
    %1265 = vmatpush.bf16.msra.mxu0 %v1253
    %1266 = vmatmul.bf16.gmra.mxu0 %v1256
    %v1267 = vpop.f32.mrf.mxu0
    %v1268 = vadd.f32 0.0, %v1267
    %v1269 = vpop.f32.mrf.mxu0
    %v1270 = vadd.f32 0.0, %v1269
    %1271 = vdwg.mxu0
    %v1272 = vadd.f32 %v1203, %v1268
    %v1273 = vadd.f32 %v1204, %v1270
    %v1274 = vpack.c.bf16 %v1273, %v1272
    %v1275 = vpack.c.bf16 %v895, %v894
    %v1276 = vpack.c.bf16 %v897, %v896
    %v1277 = vperm.slane %v901, 0
    %v1279 = vsel %vm167, %v1274, 0
    %1281 = vmatpush.bf16.msra.mxu0 0
    %1282 = vmatpush.bf16.msra.mxu0 0
    %1283 = vmatpush.bf16.msra.mxu0 0
    %1284 = vmatpush.bf16.msra.mxu0 0
    %1285 = vmatpush.bf16.msra.mxu0 0
    %1286 = vmatpush.bf16.msra.mxu0 0
    %1287 = vmatpush.bf16.msra.mxu0 %v1276
    %1288 = vmatpush.bf16.msra.mxu0 %v1275
    %1289 = vmatmul.bf16.gmra.mxu0 %v1279
    %v1290 = vpop.f32.mrf.mxu0
    %v1291 = vadd.f32 %v1277, %v1290
    %v1292 = vpop.f32.mrf.mxu0
    %v1293 = vadd.f32 %v1277, %v1292
    %1294 = vdwg.mxu0
    %v1295 = vadd.f32 %v1291, %v886
    %v1296 = vadd.f32 %v1293, %v887
    %v1297 = vld [vmem:[#allocation10 + $0x4] sm:$0x1]
    %v1298 = vld [vmem:[#allocation10 + $0x9] sm:$0x1]
    %v1299 = vsel %vm167, %v1295, 0.0
    %1300 = vadd.xlane.f32.xlu0 %v1299
    %v1301 = vpop.xlane.xlu0 %1300
    %v1302 = vsel %vm167, %v1296, 0.0
    %1303 = vadd.xlane.f32.xlu0 %v1302
    %v1304 = vpop.xlane.xlu0 %1303
    %v1305 = vmul.f32 %v1301, %v283
    %v1306 = vmul.f32 %v1304, %v283
    %v1307 = vsub.f32 %v1295, %v1305
    %v1308 = vsub.f32 %v1296, %v1306
    %v1309 = vmul.f32 %v1307, %v1307
    %v1310 = vmul.f32 %v1308, %v1308
    %v1311 = vsel %vm167, %v1309, 0.0
    %1312 = vadd.xlane.f32.xlu0 %v1311
    %v1313 = vpop.xlane.xlu0 %1312
    %v1314 = vsel %vm167, %v1310, 0.0
    %1315 = vadd.xlane.f32.xlu0 %v1314
    %v1316 = vpop.xlane.xlu0 %1315
    %v1317 = vmul.f32 %v1313, %v283
    %v1318 = vmul.f32 %v1316, %v283
    %v1319 = vadd.f32 %v1317, 1e-05
    %v1320 = vadd.f32 %v1318, 1e-05
    %v1321 = vrsqrt.pop %v1319
    %v1322 = vmul.f32 %v1321, %v1319
    %v1323 = vmul.f32 %v1322, %v1321
    %v1324 = vmul.f32 0.5, %v1323
    %v1325 = vsub.f32 1.5, %v1324
    %v1326 = vmul.f32 %v1321, %v1325
    %vm1327 = vweird.f32 %v1319
    %vm1328 = vweird.f32 %v1321
    %vm1329 = vmor %vm1327, %vm1328
    %v1330 = vsel %vm1329, %v1321, %v1326
    %v1331 = vrsqrt.pop %v1320
    %v1332 = vmul.f32 %v1331, %v1320
    %v1333 = vmul.f32 %v1332, %v1331
    %v1334 = vmul.f32 0.5, %v1333
    %v1335 = vsub.f32 1.5, %v1334
    %v1336 = vmul.f32 %v1331, %v1335
    %vm1337 = vweird.f32 %v1320
    %vm1338 = vweird.f32 %v1331
    %vm1339 = vmor %vm1337, %vm1338
    %v1340 = vsel %vm1339, %v1331, %v1336
    %v1341 = vmul.f32 %v1307, %v1330
    %v1342 = vmul.f32 %v1308, %v1340
    %v1343 = vperm.slane %v1297, 0
    %v1344 = vmul.f32 %v1341, %v1343
    %v1345 = vmul.f32 %v1342, %v1343
    %v1346 = vperm.slane %v1298, 0
    %v1347 = vadd.f32 %v1344, %v1346
    %v1348 = vadd.f32 %v1345, %v1346
    %s1349 = scalar_lea.vmem [#allocation7], 224
    %v1350 = vld [vmem:[%s1349] sm:$0xff]
    %v1351 = vld [vmem:[%s1349 + $0x8] sm:$0xff]
    %v1352 = vld [vmem:[%s1349 + $0x10] sm:$0xff]
    %v1353 = vld [vmem:[%s1349 + $0x18] sm:$0xff]
    %s1354 = scalar_lea.vmem [#allocation7], 256
    %v1355 = vld [vmem:[%s1354] sm:$0xff]
    %v1356 = vld [vmem:[%s1354 + $0x8] sm:$0xff]
    %v1357 = vld [vmem:[%s1354 + $0x10] sm:$0xff]
    %v1358 = vld [vmem:[%s1354 + $0x18] sm:$0xff]
    %v1359 = vld [vmem:[#allocation10 + $0x14] sm:$0x1]
    %v1360 = vld [vmem:[#allocation10 + $0x15] sm:$0x1]
    %v1361 = vld [vmem:[#allocation10 + $0x16] sm:$0x1]
    %v1362 = vld [vmem:[#allocation10 + $0x17] sm:$0x1]
    %v1363 = vpack.c.bf16 %v1351, %v1350
    %v1364 = vpack.c.bf16 %v1353, %v1352
    %v1365 = vperm.slane %v1359, 0
    %1366 = vmatpush.bf16.msra.mxu0 0
    %1367 = vmatpush.bf16.msra.mxu0 0
    %1368 = vmatpush.bf16.msra.mxu0 0
    %1369 = vmatpush.bf16.msra.mxu0 0
    %1370 = vmatpush.bf16.msra.mxu0 0
    %1371 = vmatpush.bf16.msra.mxu0 0
    %1372 = vmatpush.bf16.msra.mxu0 %v1364
    %1373 = vmatpush.bf16.msra.mxu0 %v1363
    %1374 = vmatmul.bf16.gmra.mxu0 %v934
    %v1375 = vpop.f32.mrf.mxu0
    %v1376 = vadd.f32 %v1365, %v1375
    %v1377 = vpop.f32.mrf.mxu0
    %v1378 = vadd.f32 %v1365, %v1377
    %1379 = vdwg.mxu0
    %v1380 = vmul.f32 %v1376, 0.35355338
    %v1381 = vmul.f32 %v1378, 0.35355338
    %s1382 = scalar_lea.vmem [#allocation8], 64
    %v1383 = vld [vmem:[%s1382] sm:$0xff]
    %v1384 = vld [vmem:[%s1382 + $0x8] sm:$0xff]
    %v1385 = vld [vmem:[%s1382 + $0x10] sm:$0xff]
    %v1386 = vld [vmem:[%s1382 + $0x18] sm:$0xff]
    %v1387 = vpack.c.bf16 %v1384, %v1383
    %v1388 = vpack.c.bf16 %v1386, %v1385
    %1389 = vmatpush.bf16.msra.mxu0 0
    %1390 = vmatpush.bf16.msra.mxu0 0
    %1391 = vmatpush.bf16.msra.mxu0 0
    %1392 = vmatpush.bf16.msra.mxu0 0
    %1393 = vmatpush.bf16.msra.mxu0 0
    %1394 = vmatpush.bf16.msra.mxu0 0
    %1395 = vmatpush.bf16.msra.mxu0 %v1388
    %1396 = vmatpush.bf16.msra.mxu0 %v1387
    %1397 = vmatmul.bf16.gmra.mxu0 %v907
    %v1398 = vpop.f32.mrf.mxu0
    %v1399 = vadd.f32 0.0, %v1398
    %v1400 = vpop.f32.mrf.mxu0
    %v1401 = vadd.f32 0.0, %v1400
    %1402 = vdwg.mxu0
    %v1403 = vperm.slane %v1360, 0
    %v1404 = vadd.f32 %v1399, %v1403
    %v1405 = vadd.f32 %v1401, %v1403
    %v1406 = vperm.slane %v1361, 0
    %1408 = vrot.lane.b32.xlu0 %v1406, 32
    %v1409 = vpop.permute.xlu0 %1408
    %v1411 = vadd.f32 %v1399, %v1409
    %v1412 = vadd.f32 %v1401, %v1409
    %v1413 = vpack.c.bf16 %v1380, %v1380
    %v1414 = vpack.c.bf16 %v1381, %v1381
    %1415 = vxpose.xlu0.b32.start [1/16] %v1404, 128
    %1416 = vxpose.xlu0.b32.cont [2/16] %v1405, 128
    %1417 = vxpose.xlu0.b32.cont [3/16] 0.0, 128
    %1418 = vxpose.xlu0.b32.cont [4/16] 0.0, 128
    %1419 = vxpose.xlu0.b32.cont [5/16] 0.0, 128
    %1420 = vxpose.xlu0.b32.cont [6/16] 0.0, 128
    %1421 = vxpose.xlu0.b32.cont [7/16] 0.0, 128
    %1422 = vxpose.xlu0.b32.cont [8/16] 0.0, 128
    %1423 = vxpose.xlu0.b32.cont [9/16] 0.0, 128
    %1424 = vxpose.xlu0.b32.cont [10/16] 0.0, 128
    %1425 = vxpose.xlu0.b32.cont [11/16] 0.0, 128
    %1426 = vxpose.xlu0.b32.cont [12/16] 0.0, 128
    %1427 = vxpose.xlu0.b32.cont [13/16] 0.0, 128
    %1428 = vxpose.xlu0.b32.cont [14/16] 0.0, 128
    %1429 = vxpose.xlu0.b32.cont [15/16] 0.0, 128
    %1430 = vxpose.xlu0.b32.end [16/16] 0.0, 128
    %v1431 = vpop.trf.xlu0
    %v1432 = vpop.trf.xlu0
    %v1433 = vpop.trf.xlu0
    %v1434 = vpop.trf.xlu0
    %v1435 = vpop.trf.xlu0
    %v1436 = vpop.trf.xlu0
    %v1437 = vpop.trf.xlu0
    %v1438 = vpop.trf.xlu0
    %v1439 = vpop.trf.xlu0
    %v1440 = vpop.trf.xlu0
    %v1441 = vpop.trf.xlu0
    %v1442 = vpop.trf.xlu0
    %v1443 = vpop.trf.xlu0
    %v1444 = vpop.trf.xlu0
    %v1445 = vpop.trf.xlu0
    %v1446 = vpop.trf.xlu0
    %v1447 = vpack.c.bf16 %v1432, %v1431
    %v1448 = vpack.c.bf16 %v1434, %v1433
    %v1449 = vpack.c.bf16 %v1411, %v1411
    %v1450 = vpack.c.bf16 %v1412, %v1412
    %v1451 = vunpack.c.l.bf16 %v1413
    %v1452 = vunpack.c.l.bf16 %v1414
    %v1453 = vmul.f32 %v1451, %v435
    %v1454 = vmul.f32 %v1452, %v435
    %v1455 = vpack.c.bf16 %v1454, %v1453
    %v1457 = vsel %vm167, %v1455, 0
    %1459 = vmatpush.bf16.msra.mxu0 0
    %1460 = vmatpush.bf16.msra.mxu0 0
    %1461 = vmatpush.bf16.msra.mxu0 0
    %1462 = vmatpush.bf16.msra.mxu0 0
    %1463 = vmatpush.bf16.msra.mxu0 0
    %1464 = vmatpush.bf16.msra.mxu0 0
    %1465 = vmatpush.bf16.msra.mxu0 %v1448
    %1466 = vmatpush.bf16.msra.mxu0 %v1447
    %1467 = vmatmul.bf16.gmra.mxu0 %v1457
    %v1468 = vpop.f32.mrf.mxu0
    %v1469 = vadd.f32 %v154, %v1468
    %v1470 = vpop.f32.mrf.mxu0
    %v1471 = vadd.f32 %v155, %v1470
    %1472 = vdwg.mxu0
    %v1473 = vsel %vm456, %v1469, -inf
    %1474 = vmax.xlane.f32.xlu0 %v1473
    %v1475 = vpop.xlane.xlu0 %1474
    %v1476 = vsel %vm456, %v1471, -inf
    %1477 = vmax.xlane.f32.xlu0 %v1476
    %v1478 = vpop.xlane.xlu0 %1477
    %v1479 = vsub.f32 %v1469, %v1475
    %v1480 = vsub.f32 %v1471, %v1478
    %v1481 = vmul.f32 %v1479, 1.442695
    %v1482 = vpow.pop %v1481
    %v1483 = vmul.f32 %v1480, 1.442695
    %v1484 = vpow.pop %v1483
    %v1485 = vsel %vm456, %v1482, 0.0
    %1486 = vadd.xlane.f32.xlu0 %v1485
    %v1487 = vpop.xlane.xlu0 %1486
    %v1488 = vsel %vm456, %v1484, 0.0
    %1489 = vadd.xlane.f32.xlu0 %v1488
    %v1490 = vpop.xlane.xlu0 %1489
    %v1491 = vrcp.pop %v1487
    %v1492 = vrcp.pop %v1490
    %v1493 = vmul.f32 %v1482, %v1491
    %v1494 = vmul.f32 %v1484, %v1492
    %v1495 = vpack.c.bf16 %v1494, %v1493
    %v1496 = vunpack.c.l.bf16 %v1449
    %v1497 = vunpack.c.l.bf16 %v1450
    %v1498 = vmul.f32 %v1496, %v484
    %v1499 = vmul.f32 %v1497, %v484
    %v1500 = vpack.c.bf16 %v1499, %v1498
    %v1501 = vmul.f32 %v1451, %v489
    %v1502 = vmul.f32 %v1452, %v489
    %v1503 = vpack.c.bf16 %v1502, %v1501
    %v1505 = vsel %vm167, %v1503, 0
    %1507 = vmatpush.bf16.msra.mxu0 0
    %1508 = vmatpush.bf16.msra.mxu0 0
    %1509 = vmatpush.bf16.msra.mxu0 0
    %1510 = vmatpush.bf16.msra.mxu0 0
    %1511 = vmatpush.bf16.msra.mxu0 0
    %1512 = vmatpush.bf16.msra.mxu0 0
    %1513 = vmatpush.bf16.msra.mxu0 %v1448
    %1514 = vmatpush.bf16.msra.mxu0 %v1447
    %1515 = vmatmul.bf16.gmra.mxu0 %v1505
    %v1516 = vpop.f32.mrf.mxu0
    %v1517 = vadd.f32 %v154, %v1516
    %v1518 = vpop.f32.mrf.mxu0
    %v1519 = vadd.f32 %v155, %v1518
    %1520 = vdwg.mxu0
    %v1521 = vsel %vm456, %v1517, -inf
    %1522 = vmax.xlane.f32.xlu0 %v1521
    %v1523 = vpop.xlane.xlu0 %1522
    %v1524 = vsel %vm456, %v1519, -inf
    %1525 = vmax.xlane.f32.xlu0 %v1524
    %v1526 = vpop.xlane.xlu0 %1525
    %v1527 = vsub.f32 %v1517, %v1523
    %v1528 = vsub.f32 %v1519, %v1526
    %v1529 = vmul.f32 %v1527, 1.442695
    %v1530 = vpow.pop %v1529
    %v1531 = vmul.f32 %v1528, 1.442695
    %v1532 = vpow.pop %v1531
    %v1533 = vsel %vm456, %v1530, 0.0
    %1534 = vadd.xlane.f32.xlu0 %v1533
    %v1535 = vpop.xlane.xlu0 %1534
    %v1536 = vsel %vm456, %v1532, 0.0
    %1537 = vadd.xlane.f32.xlu0 %v1536
    %v1538 = vpop.xlane.xlu0 %1537
    %v1539 = vrcp.pop %v1535
    %v1540 = vrcp.pop %v1538
    %v1541 = vmul.f32 %v1530, %v1539
    %v1542 = vmul.f32 %v1532, %v1540
    %v1543 = vpack.c.bf16 %v1542, %v1541
    %v1544 = vmul.f32 %v1496, %v535
    %v1545 = vmul.f32 %v1497, %v535
    %v1546 = vpack.c.bf16 %v1545, %v1544
    %1548 = vrot.lane.b32.xlu0 %v1546, 96
    %v1549 = vpop.permute.xlu0 %1548
    %v1552 = vsel %vm456, %v1543, 0
    %1554 = vmatpush.bf16.msra.mxu0 0
    %1555 = vmatpush.bf16.msra.mxu0 0
    %1556 = vmatpush.bf16.msra.mxu0 0
    %1557 = vmatpush.bf16.msra.mxu0 0
    %1558 = vmatpush.bf16.msra.mxu0 0
    %1559 = vmatpush.bf16.msra.mxu0 0
    %1560 = vmatpush.bf16.msra.mxu0 0
    %1561 = vmatpush.bf16.msra.mxu0 %v1549
    %1562 = vmatmul.bf16.gmra.mxu0 %v1552
    %v1563 = vpop.f32.mrf.mxu0
    %v1564 = vadd.f32 0.0, %v1563
    %v1565 = vpop.f32.mrf.mxu0
    %v1566 = vadd.f32 0.0, %v1565
    %1567 = vdwg.mxu0
    %1569 = vrot.lane.b32.xlu0 %v1500, 96
    %v1570 = vpop.permute.xlu0 %1569
    %v1573 = vsel %vm456, %v1495, 0
    %1575 = vmatpush.bf16.msra.mxu0 0
    %1576 = vmatpush.bf16.msra.mxu0 0
    %1577 = vmatpush.bf16.msra.mxu0 0
    %1578 = vmatpush.bf16.msra.mxu0 0
    %1579 = vmatpush.bf16.msra.mxu0 0
    %1580 = vmatpush.bf16.msra.mxu0 0
    %1581 = vmatpush.bf16.msra.mxu0 0
    %1582 = vmatpush.bf16.msra.mxu0 %v1570
    %1583 = vmatmul.bf16.gmra.mxu0 %v1573
    %v1584 = vpop.f32.mrf.mxu0
    %v1585 = vadd.f32 %v1564, %v1584
    %v1586 = vpop.f32.mrf.mxu0
    %v1587 = vadd.f32 %v1566, %v1586
    %1588 = vdwg.mxu0
    %v1589 = vmul.f32 %v1451, %v582
    %v1590 = vmul.f32 %v1452, %v582
    %v1591 = vpack.c.bf16 %v1590, %v1589
    %v1593 = vsel %vm167, %v1591, 0
    %1595 = vmatpush.bf16.msra.mxu0 0
    %1596 = vmatpush.bf16.msra.mxu0 0
    %1597 = vmatpush.bf16.msra.mxu0 0
    %1598 = vmatpush.bf16.msra.mxu0 0
    %1599 = vmatpush.bf16.msra.mxu0 0
    %1600 = vmatpush.bf16.msra.mxu0 0
    %1601 = vmatpush.bf16.msra.mxu0 %v1448
    %1602 = vmatpush.bf16.msra.mxu0 %v1447
    %1603 = vmatmul.bf16.gmra.mxu0 %v1593
    %v1604 = vpop.f32.mrf.mxu0
    %v1605 = vadd.f32 %v154, %v1604
    %v1606 = vpop.f32.mrf.mxu0
    %v1607 = vadd.f32 %v155, %v1606
    %1608 = vdwg.mxu0
    %v1609 = vsel %vm456, %v1605, -inf
    %1610 = vmax.xlane.f32.xlu0 %v1609
    %v1611 = vpop.xlane.xlu0 %1610
    %v1612 = vsel %vm456, %v1607, -inf
    %1613 = vmax.xlane.f32.xlu0 %v1612
    %v1614 = vpop.xlane.xlu0 %1613
    %v1615 = vsub.f32 %v1605, %v1611
    %v1616 = vsub.f32 %v1607, %v1614
    %v1617 = vmul.f32 %v1615, 1.442695
    %v1618 = vpow.pop %v1617
    %v1619 = vmul.f32 %v1616, 1.442695
    %v1620 = vpow.pop %v1619
    %v1621 = vsel %vm456, %v1618, 0.0
    %1622 = vadd.xlane.f32.xlu0 %v1621
    %v1623 = vpop.xlane.xlu0 %1622
    %v1624 = vsel %vm456, %v1620, 0.0
    %1625 = vadd.xlane.f32.xlu0 %v1624
    %v1626 = vpop.xlane.xlu0 %1625
    %v1627 = vrcp.pop %v1623
    %v1628 = vrcp.pop %v1626
    %v1629 = vmul.f32 %v1618, %v1627
    %v1630 = vmul.f32 %v1620, %v1628
    %v1631 = vpack.c.bf16 %v1630, %v1629
    %v1632 = vmul.f32 %v1496, %v628
    %v1633 = vmul.f32 %v1497, %v628
    %v1634 = vpack.c.bf16 %v1633, %v1632
    %1636 = vrot.lane.b32.xlu0 %v1634, 96
    %v1637 = vpop.permute.xlu0 %1636
    %v1640 = vsel %vm456, %v1631, 0
    %1642 = vmatpush.bf16.msra.mxu0 0
    %1643 = vmatpush.bf16.msra.mxu0 0
    %1644 = vmatpush.bf16.msra.mxu0 0
    %1645 = vmatpush.bf16.msra.mxu0 0
    %1646 = vmatpush.bf16.msra.mxu0 0
    %1647 = vmatpush.bf16.msra.mxu0 0
    %1648 = vmatpush.bf16.msra.mxu0 0
    %1649 = vmatpush.bf16.msra.mxu0 %v1637
    %1650 = vmatmul.bf16.gmra.mxu0 %v1640
    %v1651 = vpop.f32.mrf.mxu0
    %v1652 = vadd.f32 0.0, %v1651
    %v1653 = vpop.f32.mrf.mxu0
    %v1654 = vadd.f32 0.0, %v1653
    %1655 = vdwg.mxu0
    %v1656 = vadd.f32 %v1585, %v1652
    %v1657 = vadd.f32 %v1587, %v1654
    %v1658 = vmul.f32 %v1451, %v656
    %v1659 = vmul.f32 %v1452, %v656
    %v1660 = vpack.c.bf16 %v1659, %v1658
    %v1662 = vsel %vm167, %v1660, 0
    %1664 = vmatpush.bf16.msra.mxu0 0
    %1665 = vmatpush.bf16.msra.mxu0 0
    %1666 = vmatpush.bf16.msra.mxu0 0
    %1667 = vmatpush.bf16.msra.mxu0 0
    %1668 = vmatpush.bf16.msra.mxu0 0
    %1669 = vmatpush.bf16.msra.mxu0 0
    %1670 = vmatpush.bf16.msra.mxu0 %v1448
    %1671 = vmatpush.bf16.msra.mxu0 %v1447
    %1672 = vmatmul.bf16.gmra.mxu0 %v1662
    %v1673 = vpop.f32.mrf.mxu0
    %v1674 = vadd.f32 %v154, %v1673
    %v1675 = vpop.f32.mrf.mxu0
    %v1676 = vadd.f32 %v155, %v1675
    %1677 = vdwg.mxu0
    %v1678 = vsel %vm456, %v1674, -inf
    %1679 = vmax.xlane.f32.xlu0 %v1678
    %v1680 = vpop.xlane.xlu0 %1679
    %v1681 = vsel %vm456, %v1676, -inf
    %1682 = vmax.xlane.f32.xlu0 %v1681
    %v1683 = vpop.xlane.xlu0 %1682
    %v1684 = vsub.f32 %v1674, %v1680
    %v1685 = vsub.f32 %v1676, %v1683
    %v1686 = vmul.f32 %v1684, 1.442695
    %v1687 = vpow.pop %v1686
    %v1688 = vmul.f32 %v1685, 1.442695
    %v1689 = vpow.pop %v1688
    %v1690 = vsel %vm456, %v1687, 0.0
    %1691 = vadd.xlane.f32.xlu0 %v1690
    %v1692 = vpop.xlane.xlu0 %1691
    %v1693 = vsel %vm456, %v1689, 0.0
    %1694 = vadd.xlane.f32.xlu0 %v1693
    %v1695 = vpop.xlane.xlu0 %1694
    %v1696 = vrcp.pop %v1692
    %v1697 = vrcp.pop %v1695
    %v1698 = vmul.f32 %v1687, %v1696
    %v1699 = vmul.f32 %v1689, %v1697
    %v1700 = vpack.c.bf16 %v1699, %v1698
    %v1701 = vmul.f32 %v1496, %v702
    %v1702 = vmul.f32 %v1497, %v702
    %v1703 = vpack.c.bf16 %v1702, %v1701
    %1705 = vrot.lane.b32.xlu0 %v1703, 96
    %v1706 = vpop.permute.xlu0 %1705
    %v1709 = vsel %vm456, %v1700, 0
    %1711 = vmatpush.bf16.msra.mxu0 0
    %1712 = vmatpush.bf16.msra.mxu0 0
    %1713 = vmatpush.bf16.msra.mxu0 0
    %1714 = vmatpush.bf16.msra.mxu0 0
    %1715 = vmatpush.bf16.msra.mxu0 0
    %1716 = vmatpush.bf16.msra.mxu0 0
    %1717 = vmatpush.bf16.msra.mxu0 0
    %1718 = vmatpush.bf16.msra.mxu0 %v1706
    %1719 = vmatmul.bf16.gmra.mxu0 %v1709
    %v1720 = vpop.f32.mrf.mxu0
    %v1721 = vadd.f32 0.0, %v1720
    %v1722 = vpop.f32.mrf.mxu0
    %v1723 = vadd.f32 0.0, %v1722
    %1724 = vdwg.mxu0
    %v1725 = vadd.f32 %v1656, %v1721
    %v1726 = vadd.f32 %v1657, %v1723
    %v1727 = vpack.c.bf16 %v1726, %v1725
    %v1728 = vpack.c.bf16 %v1356, %v1355
    %v1729 = vpack.c.bf16 %v1358, %v1357
    %v1730 = vperm.slane %v1362, 0
    %v1732 = vsel %vm167, %v1727, 0
    %1734 = vmatpush.bf16.msra.mxu0 0
    %1735 = vmatpush.bf16.msra.mxu0 0
    %1736 = vmatpush.bf16.msra.mxu0 0
    %1737 = vmatpush.bf16.msra.mxu0 0
    %1738 = vmatpush.bf16.msra.mxu0 0
    %1739 = vmatpush.bf16.msra.mxu0 0
    %1740 = vmatpush.bf16.msra.mxu0 %v1729
    %1741 = vmatpush.bf16.msra.mxu0 %v1728
    %1742 = vmatmul.bf16.gmra.mxu0 %v1732
    %v1743 = vpop.f32.mrf.mxu0
    %v1744 = vadd.f32 %v1730, %v1743
    %v1745 = vpop.f32.mrf.mxu0
    %v1746 = vadd.f32 %v1730, %v1745
    %1747 = vdwg.mxu0
    %v1748 = vadd.f32 %v1744, %v326
    %v1749 = vadd.f32 %v1746, %v327
    %v1750 = vld [vmem:[#allocation10 + $0x5] sm:$0x1]
    %v1751 = vld [vmem:[#allocation10 + $0xa] sm:$0x1]
    %v1752 = vsel %vm167, %v1748, 0.0
    %1753 = vadd.xlane.f32.xlu0 %v1752
    %v1754 = vpop.xlane.xlu0 %1753
    %v1755 = vsel %vm167, %v1749, 0.0
    %1756 = vadd.xlane.f32.xlu0 %v1755
    %v1757 = vpop.xlane.xlu0 %1756
    %v1758 = vmul.f32 %v1754, %v283
    %v1759 = vmul.f32 %v1757, %v283
    %v1760 = vsub.f32 %v1748, %v1758
    %v1761 = vsub.f32 %v1749, %v1759
    %v1762 = vmul.f32 %v1760, %v1760
    %v1763 = vmul.f32 %v1761, %v1761
    %v1764 = vsel %vm167, %v1762, 0.0
    %1765 = vadd.xlane.f32.xlu0 %v1764
    %v1766 = vpop.xlane.xlu0 %1765
    %v1767 = vsel %vm167, %v1763, 0.0
    %1768 = vadd.xlane.f32.xlu0 %v1767
    %v1769 = vpop.xlane.xlu0 %1768
    %v1770 = vmul.f32 %v1766, %v283
    %v1771 = vmul.f32 %v1769, %v283
    %v1772 = vadd.f32 %v1770, 1e-05
    %v1773 = vadd.f32 %v1771, 1e-05
    %v1774 = vrsqrt.pop %v1772
    %v1775 = vmul.f32 %v1774, %v1772
    %v1776 = vmul.f32 %v1775, %v1774
    %v1777 = vmul.f32 0.5, %v1776
    %v1778 = vsub.f32 1.5, %v1777
    %v1779 = vmul.f32 %v1774, %v1778
    %vm1780 = vweird.f32 %v1772
    %vm1781 = vweird.f32 %v1774
    %vm1782 = vmor %vm1780, %vm1781
    %v1783 = vsel %vm1782, %v1774, %v1779
    %v1784 = vrsqrt.pop %v1773
    %v1785 = vmul.f32 %v1784, %v1773
    %v1786 = vmul.f32 %v1785, %v1784
    %v1787 = vmul.f32 0.5, %v1786
    %v1788 = vsub.f32 1.5, %v1787
    %v1789 = vmul.f32 %v1784, %v1788
    %vm1790 = vweird.f32 %v1773
    %vm1791 = vweird.f32 %v1784
    %vm1792 = vmor %vm1790, %vm1791
    %v1793 = vsel %vm1792, %v1784, %v1789
    %v1794 = vmul.f32 %v1760, %v1783
    %v1795 = vmul.f32 %v1761, %v1793
    %v1796 = vperm.slane %v1750, 0
    %v1797 = vmul.f32 %v1794, %v1796
    %v1798 = vmul.f32 %v1795, %v1796
    %v1799 = vperm.slane %v1751, 0
    %v1800 = vadd.f32 %v1797, %v1799
    %v1801 = vadd.f32 %v1798, %v1799
    %1802 = vst.msk [vmem:[#allocation11] sm:$0xff] %vm167, %v1800
    %1803 = vst.msk [vmem:[#allocation11 + $0x8] sm:$0xff] %vm167, %v1801
    %1804 = vst.msk [vmem:[#allocation12] sm:$0xff] %vm167, %v1347
    %1805 = vst.msk [vmem:[#allocation12 + $0x8] sm:$0xff] %vm167, %v1348
    // Predicated region
    $region42: #{timesformer_layer.1} parent=1 // pred_check
      _
    $region43: #{timesformer_layer.1} parent=1 // pred_check_branch
      %1807 = sbr.rel (0) target = $region45
    $region44: #{timesformer_layer.1} parent=1 // pred_region
      %1809 = vsyncadd [#allocation4], 0
      %s1810 = sshll.u32 [#allocation11], 4
      %s1811 = int_to_ptr.vmem [resolvable:$true] %s1810
      %s1812 = sshll.u32 %s5, 4
      %s1813 = int_to_ptr.hbm [resolvable:$true] %s1812
      %1818 = dma.vmem_to_hbm [thread:$0]  %s1811, 256, %s1813, [#allocation4], 128, 128, 8
    $region45: #{timesformer_layer.1} parent=1 // pred_fallthru
      _
    // Predicated region
    $region46: #{timesformer_layer.1} parent=1 // pred_check
      _
    $region47: #{timesformer_layer.1} parent=1 // pred_check_branch
      %1820 = sbr.rel (0) target = $region49
    $region48: #{timesformer_layer.1} parent=1 // pred_region
      %1822 = vsyncadd [#allocation13], 0
      %s1823 = sshll.u32 [#allocation12], 4
      %s1824 = int_to_ptr.vmem [resolvable:$true] %s1823
      %s1825 = sshll.u32 %s6, 4
      %s1826 = int_to_ptr.hbm [resolvable:$true] %s1825
      %1831 = dma.vmem_to_hbm [thread:$0]  %s1824, 256, %s1826, [#allocation13], 128, 128, 8
    $region49: #{timesformer_layer.1} parent=1 // pred_fallthru
      _
    // Predicated region
    $region50: #{timesformer_layer.1} parent=1 // pred_check
      _
    $region51: #{timesformer_layer.1} parent=1 // pred_check_branch
      %1833 = sbr.rel (0) target = $region53
    $region52: #{timesformer_layer.1} parent=1 // pred_region
      %1835 = dma.done [#allocation4], 256
    $region53: #{timesformer_layer.1} parent=1 // pred_fallthru
      _
    // Predicated region
    $region54: #{timesformer_layer.1} parent=1 // pred_check
      _
    $region55: #{timesformer_layer.1} parent=1 // pred_check_branch
      %1837 = sbr.rel (0) target = $region57
    $region56: #{timesformer_layer.1} parent=1 // pred_region
      %1839 = dma.done [#allocation13], 256
    $region57: #{timesformer_layer.1} parent=1 // pred_fallthru
      _
    %1840 = vsyncpa [#allocation3], 1
    %1841 = vsyncpa [#allocation6], 1
    %1842 = vsyncpa [#allocation9], 1
    %1843 = vsyncpa [#allocation4], 1
    %1844 = vsyncpa [#allocation13], 1

</llo_original>
